<compile_context>
chip_gen: v5e
topology: v5e:2x2
jax: 0.10.0
libtpu: 0.0.40
codegen_flags: <defaults>
</compile_context>

<pallas_src>
import functools

import jax
import jax.numpy as jnp
from jax.experimental import pallas as pl
from jax.experimental.pallas import tpu as pltpu

LANE = 128


def _round_up(x, m):
    return (x + m - 1) // m * m


# ---------------------------------------------------------------------------
# Kernel 1: dense (kt,1,1) conv over time + folded BN + act (+ fused residual)
# ---------------------------------------------------------------------------

def _tconv_kernel(*refs, taps, act, add_res):
    if add_res:
        x_ref, w_ref, scale_ref, shift_ref, res_ref, o_ref = refs
    else:
        x_ref, w_ref, scale_ref, shift_ref, o_ref = refs
        res_ref = None

    _, Tp, HW, Cin = x_ref.shape
    T = Tp - (taps - 1)
    Cout = w_ref.shape[2]

    acc = jnp.zeros((T * HW, Cout), jnp.float32)
    # Fused "im2col": accumulate the temporal taps from shifted views of the padded
    # VMEM tile — no patch matrix ever touches HBM.  bf16 operands, f32 accumulation.
    for k in range(taps):
        xs = x_ref[0, k:k + T].reshape(T * HW, Cin)
        acc = acc + jnp.dot(xs, w_ref[k], preferred_element_type=jnp.float32)

    y = acc * scale_ref[...] + shift_ref[...]          # folded BatchNorm (f32 epilogue)
    if act == "silu":
        y = y * jax.nn.sigmoid(y)
    if add_res:                                        # residual fused into the epilogue
        y = y + res_ref[0].reshape(T * HW, Cout).astype(jnp.float32)
    o_ref[0] = y.reshape(T, HW, Cout).astype(o_ref.dtype)


def tconv_bn_act(x_pad, w, scale, shift, *, act, out_dtype, residual=None):
    """Dense (kt,1,1) conv, time pre-padded.  x_pad: (B, T+kt-1, H*W, Cin) channels-last,
    bf16.  w: (kt, Cin, Cout) bf16.  scale/shift: (Cout,) f32 (folded BN)."""
    B, Tp, HW, Cin = x_pad.shape
    taps, _, Cout = w.shape
    T = Tp - (taps - 1)
    add_res = residual is not None

    inputs = [x_pad, w, scale.reshape(1, Cout), shift.reshape(1, Cout)]
    in_specs = [
        pl.BlockSpec((1, Tp, HW, Cin), lambda b: (b, 0, 0, 0)),
        pl.BlockSpec((taps, Cin, Cout), lambda b: (0, 0, 0)),
        pl.BlockSpec((1, Cout), lambda b: (0, 0)),
        pl.BlockSpec((1, Cout), lambda b: (0, 0)),
    ]
    if add_res:
        inputs.append(residual)
        in_specs.append(pl.BlockSpec((1, T, HW, Cout), lambda b: (b, 0, 0, 0)))

    return pl.pallas_call(
        functools.partial(_tconv_kernel, taps=taps, act=act, add_res=add_res),
        out_shape=jax.ShapeDtypeStruct((B, T, HW, Cout), out_dtype),
        grid=(B,),
        in_specs=in_specs,
        out_specs=pl.BlockSpec((1, T, HW, Cout), lambda b: (b, 0, 0, 0)),
        compiler_params=pltpu.CompilerParams(dimension_semantics=("parallel",)),
    )(*inputs)


# ---------------------------------------------------------------------------
# Kernel 2: depthwise (kt,kh,kw) conv + folded BN + act
# ---------------------------------------------------------------------------

def _dwconv_kernel(x_ref, w_ref, scale_ref, shift_ref, o_ref, *, kt, kh, kw, act):
    _, Tp, Hp, Wp, C = x_ref.shape
    T, H, W = Tp - (kt - 1), Hp - (kh - 1), Wp - (kw - 1)
    scale = scale_ref[...].reshape(1, 1, C)
    shift = shift_ref[...].reshape(1, 1, C)

    for t in range(T):                                  # small static T; taps unrolled
        acc = jnp.zeros((H, W, C), jnp.float32)
        for dt in range(kt):
            for dh in range(kh):
                for dw in range(kw):
                    idx = dt * kh * kw + dh * kw + dw
                    tap = x_ref[0, t + dt, dh:dh + H, dw:dw + W, :].astype(jnp.float32)
                    wv = w_ref[idx:idx + 1, :].reshape(1, 1, C)
                    acc = acc + tap * wv
        y = acc * scale + shift                         # folded BatchNorm
        if act == "silu":
            y = y * jax.nn.sigmoid(y)
        o_ref[0, t] = y.astype(o_ref.dtype)


def dwconv_bn_act(x_pad, w, scale, shift, *, act, out_dtype=jnp.bfloat16,
                  kt=3, kh=3, kw=3):
    """Depthwise conv, spatially/temporally pre-padded.  x_pad: (B, T+kt-1, H+kh-1,
    W+kw-1, C) channels-last bf16.  w: (kt*kh*kw, C) f32.  scale/shift: (C,) f32."""
    B, Tp, Hp, Wp, C = x_pad.shape
    T, H, W = Tp - (kt - 1), Hp - (kh - 1), Wp - (kw - 1)
    return pl.pallas_call(
        functools.partial(_dwconv_kernel, kt=kt, kh=kh, kw=kw, act=act),
        out_shape=jax.ShapeDtypeStruct((B, T, H, W, C), out_dtype),
        grid=(B,),
        in_specs=[
            pl.BlockSpec((1, Tp, Hp, Wp, C), lambda b: (b, 0, 0, 0, 0)),
            pl.BlockSpec((kt * kh * kw, C), lambda b: (0, 0)),
            pl.BlockSpec((1, C), lambda b: (0, 0)),
            pl.BlockSpec((1, C), lambda b: (0, 0)),
        ],
        out_specs=pl.BlockSpec((1, T, H, W, C), lambda b: (b, 0, 0, 0, 0)),
        compiler_params=pltpu.CompilerParams(dimension_semantics=("parallel",)),
    )(x_pad, w, scale.reshape(1, C), shift.reshape(1, C))


# ---------------------------------------------------------------------------
# Full block forward
# ---------------------------------------------------------------------------

def inverted_residual_3d(x, p, use_res_connect=True):
    """x: (B, C, T, H, W) f32 NCDHW -> (B, C, T, H, W) f32."""
    B, C, T, H, W = x.shape
    Cp, Hidp = p["Cp"], p["Hidp"]
    assert (H * W) % 8 == 0, "H*W must be a multiple of 8 (sublane tiling)"

    # NCDHW -> channels-last, lane-pad channels (zeros), bf16 for the MXU path.
    xl = jnp.transpose(x, (0, 2, 3, 4, 1))                          # (B,T,H,W,C)
    xl = jnp.pad(xl, ((0, 0), (0, 0), (0, 0), (0, 0), (0, Cp - C)))  # (B,T,H,W,Cp) f32
    x_bf = xl.astype(jnp.bfloat16)

    # 1) expand (3,1,1) conv + BN + SiLU
    h = jnp.pad(x_bf, ((0, 0), (1, 1), (0, 0), (0, 0), (0, 0)))
    h = h.reshape(B, T + 2, H * W, Cp)
    h = tconv_bn_act(h, p["w1"], p["s1"], p["b1"], act="silu", out_dtype=jnp.bfloat16)

    # 2) depthwise (3,3,3) conv + BN + SiLU
    h = jnp.pad(h.reshape(B, T, H, W, Hidp),
                ((0, 0), (1, 1), (1, 1), (1, 1), (0, 0)))
    h = dwconv_bn_act(h, p["w2"], p["s2"], p["b2"], act="silu")

    # 3) project (3,1,1) conv + BN, residual add fused into the kernel epilogue
    h = jnp.pad(h, ((0, 0), (1, 1), (0, 0), (0, 0), (0, 0)))
    h = h.reshape(B, T + 2, H * W, Hidp)
    res = xl.reshape(B, T, H * W, Cp) if use_res_connect else None
    out = tconv_bn_act(h, p["w3"], p["s3"], p["b3"], act="none",
                       out_dtype=jnp.float32, residual=res)

    out = out.reshape(B, T, H, W, Cp)[..., :C]
    return jnp.transpose(out, (0, 4, 1, 2, 3))


# ---------------------------------------------------------------------------
# Parameter init (raw PyTorch-layout weights + packed/folded kernel weights)
# ---------------------------------------------------------------------------

def init_params(key, C, hid, lane=LANE):
    Cp, Hp = _round_up(C, lane), _round_up(hid, lane)
    ks = iter(jax.random.split(key, 16))

    def nrm(shape, s=0.1):
        return jax.random.normal(next(ks), shape, jnp.float32) * s

    def bn(n):
        return dict(gamma=1.0 + nrm((n,)), beta=nrm((n,)),
                    mean=nrm((n,)), var=1.0 + jnp.abs(nrm((n,))))

    raw = dict(
        w1=nrm((hid, C, 3, 1, 1)), bn1=bn(hid),      # expand (inflated 1x1 -> 3x1x1)
        w2=nrm((hid, 1, 3, 3, 3)), bn2=bn(hid),      # depthwise 3x3x3, groups=hid
        w3=nrm((C, hid, 3, 1, 1)), bn3=bn(C),        # project (inflated 1x1 -> 3x1x1)
    )

    def fold(b, eps=1e-5):                           # BatchNorm3d inference fold
        s = b["gamma"] / jnp.sqrt(b["var"] + eps)
        return s, b["beta"] - b["mean"] * s

    def pack_t(w, cinp, coutp):                      # (cout,cin,kt,1,1) -> (kt,cinp,coutp) bf16
        cout, cin, kt = w.shape[:3]
        wt = jnp.transpose(w[:, :, :, 0, 0], (2, 1, 0))
        wt = jnp.pad(wt, ((0, 0), (0, cinp - cin), (0, coutp - cout)))
        return wt.astype(jnp.bfloat16)

    def pad_vec(v, n):
        return jnp.pad(v, (0, n - v.shape[0]))

    s1, b1 = fold(raw["bn1"])
    s2, b2 = fold(raw["bn2"])
    s3, b3 = fold(raw["bn3"])
    packed = dict(
        Cp=Cp, Hidp=Hp,
        w1=pack_t(raw["w1"], Cp, Hp), s1=pad_vec(s1, Hp), b1=pad_vec(b1, Hp),
        w2=jnp.pad(raw["w2"].reshape(hid, 27).T, ((0, 0), (0, Hp - hid))),
        s2=pad_vec(s2, Hp), b2=pad_vec(b2, Hp),
        w3=pack_t(raw["w3"], Hp, Cp), s3=pad_vec(s3, Cp), b3=pad_vec(b3, Cp),
    )
    return packed, raw


# ---------------------------------------------------------------------------
# Pure-JAX reference (for a loose numerical sanity check; uses the same
# bf16-rounded weights as the kernels for the dense convs)
# ---------------------------------------------------------------------------

def reference(x, raw, use_res_connect=True, eps=1e-5):
    dn = ("NCDHW", "OIDHW", "NCDHW")

    def bn(y, b):
        s = b["gamma"] / jnp.sqrt(b["var"] + eps)
        sh = b["beta"] - b["mean"] * s
        return y * s[None, :, None, None, None] + sh[None, :, None, None, None]

    def silu(y):
        return y * jax.nn.sigmoid(y)

    def r(w):  # emulate the kernels' bf16 weight storage
        return w.astype(jnp.bfloat16).astype(jnp.float32)

    y = jax.lax.conv_general_dilated(x, r(raw["w1"]), (1, 1, 1),
                                     ((1, 1), (0, 0), (0, 0)), dimension_numbers=dn)
    y = silu(bn(y, raw["bn1"]))
    y = jax.lax.conv_general_dilated(y, raw["w2"], (1, 1, 1),
                                     ((1, 1), (1, 1), (1, 1)), dimension_numbers=dn,
                                     feature_group_count=raw["w2"].shape[0])
    y = silu(bn(y, raw["bn2"]))
    y = jax.lax.conv_general_dilated(y, r(raw["w3"]), (1, 1, 1),
                                     ((1, 1), (0, 0), (0, 0)), dimension_numbers=dn)
    y = bn(y, raw["bn3"])
    return x + y if use_res_connect else y


if __name__ == "__main__":
    key = jax.random.PRNGKey(0)
    kx, kp = jax.random.split(key)

    B, C, T, H, W = 2, 4, 4, 8, 8            # NCDHW input, like the PyTorch module
    expansion = 4
    hid = C * expansion                       # hidden (expanded) channels = 16

    x = jax.random.normal(kx, (B, C, T, H, W), jnp.float32)
    params, raw = init_params(kp, C, hid)

    out = inverted_residual_3d(x, params, use_res_connect=True)
    out = jax.block_until_ready(out)

    assert out.shape == (B, C, T, H, W), out.shape
    assert bool(jnp.all(jnp.isfinite(out)))

    ref = reference(x, raw, use_res_connect=True)
    max_err = float(jnp.max(jnp.abs(out - ref)))
    assert max_err < 5e-2, f"max abs err {max_err}"   # bf16 activation rounding only

    print("KERNEL_OK")
</pallas_src>

<mosaic_0001>
module attributes {stable_mosaic.version = 11 : i64} {
  func.func @_tconv_kernel(%arg0: i32, %arg1: memref<1x6x64x128xbf16, #tpu.memory_space<vmem>>, %arg2: memref<3x128x128xbf16, #tpu.memory_space<vmem>>, %arg3: memref<1x128xf32, #tpu.memory_space<vmem>>, %arg4: memref<1x128xf32, #tpu.memory_space<vmem>>, %arg5: memref<1x4x64x128xbf16, #tpu.memory_space<vmem>>) attributes {dimension_semantics = [#tpu.dimension_semantics<parallel>], iteration_bounds = array<i64: 2>, scalar_prefetch = 0 : i64, scratch_operands = 0 : i64, tpu.core_type = #tpu.core_type<tc>, window_params = [{transform_indices = @transform_0, window_bounds = array<i64: 1, 6, 64, 128>}, {pipeline_mode = #tpu.pipeline_mode<synchronous>, transform_indices = @transform_1, window_bounds = array<i64: 3, 128, 128>}, {pipeline_mode = #tpu.pipeline_mode<synchronous>, transform_indices = @transform_2, window_bounds = array<i64: 1, 128>}, {pipeline_mode = #tpu.pipeline_mode<synchronous>, transform_indices = @transform_3, window_bounds = array<i64: 1, 128>}, {transform_indices = @transform_4, window_bounds = array<i64: 1, 4, 64, 128>}]} {
    %cst = arith.constant 0.000000e+00 : f32
    %0 = vector.broadcast %cst : f32 to vector<256x128xf32>
    %c0 = arith.constant 0 : index
    %c0_0 = arith.constant 0 : index
    %c0_1 = arith.constant 0 : index
    %c0_2 = arith.constant 0 : index
    %1 = vector.load %arg1[%c0, %c0_0, %c0_1, %c0_2] : memref<1x6x64x128xbf16, #tpu.memory_space<vmem>>, vector<1x4x64x128xbf16>
    %2 = vector.shape_cast %1 : vector<1x4x64x128xbf16> to vector<4x64x128xbf16>
    %3 = vector.shape_cast %2 : vector<4x64x128xbf16> to vector<256x128xbf16>
    %c0_3 = arith.constant 0 : index
    %c0_4 = arith.constant 0 : index
    %c0_5 = arith.constant 0 : index
    %4 = vector.load %arg2[%c0_3, %c0_4, %c0_5] : memref<3x128x128xbf16, #tpu.memory_space<vmem>>, vector<1x128x128xbf16>
    %5 = vector.shape_cast %4 : vector<1x128x128xbf16> to vector<128x128xbf16>
    %cst_6 = arith.constant dense<0.000000e+00> : vector<256x128xf32>
    %6 = tpu.matmul %3, %5, %cst_6 {dimension_numbers = #tpu.dot_dimension_numbers<[1], [0], [0], [1], [0, 0, 1, 1], [], []>} : vector<256x128xbf16>, vector<128x128xbf16>, vector<256x128xf32> -> vector<256x128xf32>
    %7 = arith.addf %0, %6 : vector<256x128xf32>
    %c0_7 = arith.constant 0 : index
    %c1 = arith.constant 1 : index
    %c0_8 = arith.constant 0 : index
    %c0_9 = arith.constant 0 : index
    %8 = vector.load %arg1[%c0_7, %c1, %c0_8, %c0_9] : memref<1x6x64x128xbf16, #tpu.memory_space<vmem>>, vector<1x4x64x128xbf16>
    %9 = vector.shape_cast %8 : vector<1x4x64x128xbf16> to vector<4x64x128xbf16>
    %10 = vector.shape_cast %9 : vector<4x64x128xbf16> to vector<256x128xbf16>
    %c1_10 = arith.constant 1 : index
    %c0_11 = arith.constant 0 : index
    %c0_12 = arith.constant 0 : index
    %11 = vector.load %arg2[%c1_10, %c0_11, %c0_12] : memref<3x128x128xbf16, #tpu.memory_space<vmem>>, vector<1x128x128xbf16>
    %12 = vector.shape_cast %11 : vector<1x128x128xbf16> to vector<128x128xbf16>
    %cst_13 = arith.constant dense<0.000000e+00> : vector<256x128xf32>
    %13 = tpu.matmul %10, %12, %cst_13 {dimension_numbers = #tpu.dot_dimension_numbers<[1], [0], [0], [1], [0, 0, 1, 1], [], []>} : vector<256x128xbf16>, vector<128x128xbf16>, vector<256x128xf32> -> vector<256x128xf32>
    %14 = arith.addf %7, %13 : vector<256x128xf32>
    %c0_14 = arith.constant 0 : index
    %c2 = arith.constant 2 : index
    %c0_15 = arith.constant 0 : index
    %c0_16 = arith.constant 0 : index
    %15 = vector.load %arg1[%c0_14, %c2, %c0_15, %c0_16] : memref<1x6x64x128xbf16, #tpu.memory_space<vmem>>, vector<1x4x64x128xbf16>
    %16 = vector.shape_cast %15 : vector<1x4x64x128xbf16> to vector<4x64x128xbf16>
    %17 = vector.shape_cast %16 : vector<4x64x128xbf16> to vector<256x128xbf16>
    %c2_17 = arith.constant 2 : index
    %c0_18 = arith.constant 0 : index
    %c0_19 = arith.constant 0 : index
    %18 = vector.load %arg2[%c2_17, %c0_18, %c0_19] : memref<3x128x128xbf16, #tpu.memory_space<vmem>>, vector<1x128x128xbf16>
    %19 = vector.shape_cast %18 : vector<1x128x128xbf16> to vector<128x128xbf16>
    %cst_20 = arith.constant dense<0.000000e+00> : vector<256x128xf32>
    %20 = tpu.matmul %17, %19, %cst_20 {dimension_numbers = #tpu.dot_dimension_numbers<[1], [0], [0], [1], [0, 0, 1, 1], [], []>} : vector<256x128xbf16>, vector<128x128xbf16>, vector<256x128xf32> -> vector<256x128xf32>
    %21 = arith.addf %14, %20 : vector<256x128xf32>
    %c0_21 = arith.constant 0 : index
    %c0_22 = arith.constant 0 : index
    %22 = vector.load %arg3[%c0_21, %c0_22] : memref<1x128xf32, #tpu.memory_space<vmem>>, vector<1x128xf32>
    %23 = vector.broadcast %22 : vector<1x128xf32> to vector<256x128xf32>
    %24 = arith.mulf %21, %23 : vector<256x128xf32>
    %c0_23 = arith.constant 0 : index
    %c0_24 = arith.constant 0 : index
    %25 = vector.load %arg4[%c0_23, %c0_24] : memref<1x128xf32, #tpu.memory_space<vmem>>, vector<1x128xf32>
    %26 = vector.broadcast %25 : vector<1x128xf32> to vector<256x128xf32>
    %27 = arith.addf %24, %26 : vector<256x128xf32>
    %28 = arith.negf %27 : vector<256x128xf32>
    %29 = math.exp %28 : vector<256x128xf32>
    %cst_25 = arith.constant 1.000000e+00 : f32
    %30 = vector.broadcast %cst_25 : f32 to vector<256x128xf32>
    %31 = arith.addf %30, %29 : vector<256x128xf32>
    %32 = arith.divf %30, %31 : vector<256x128xf32>
    %33 = arith.mulf %27, %32 : vector<256x128xf32>
    %34 = vector.shape_cast %33 : vector<256x128xf32> to vector<4x64x128xf32>
    %35 = arith.truncf %34 : vector<4x64x128xf32> to vector<4x64x128xbf16>
    %c0_26 = arith.constant 0 : index
    %c0_27 = arith.constant 0 : index
    %c0_28 = arith.constant 0 : index
    %c0_29 = arith.constant 0 : index
    %36 = vector.load %arg5[%c0_26, %c0_27, %c0_28, %c0_29] : memref<1x4x64x128xbf16, #tpu.memory_space<vmem>>, vector<1x4x64x128xbf16>
    %37 = vector.shape_cast %36 : vector<1x4x64x128xbf16> to vector<4x64x128xbf16>
    %38 = vector.shape_cast %35 : vector<4x64x128xbf16> to vector<1x4x64x128xbf16>
    tpu.vector_store %arg5[%c0_26, %c0_27, %c0_28, %c0_29], %38 {strides = array<i32>} : memref<1x4x64x128xbf16, #tpu.memory_space<vmem>>, vector<1x4x64x128xbf16>,
    return
  }
  func.func @transform_0(%arg0: i32) -> (i32, i32, i32, i32) {
    %c0_i32 = arith.constant 0 : i32
    %c0_i32_0 = arith.constant 0 : i32
    %c0_i32_1 = arith.constant 0 : i32
    %c0_i32_2 = arith.constant 0 : i32
    return %arg0, %c0_i32, %c0_i32_0, %c0_i32_1 : i32, i32, i32, i32
  }
  func.func @transform_1(%arg0: i32) -> (i32, i32, i32) {
    %c0_i32 = arith.constant 0 : i32
    %c0_i32_0 = arith.constant 0 : i32
    %c0_i32_1 = arith.constant 0 : i32
    %c0_i32_2 = arith.constant 0 : i32
    return %c0_i32, %c0_i32_0, %c0_i32_1 : i32, i32, i32
  }
  func.func @transform_2(%arg0: i32) -> (i32, i32) {
    %c0_i32 = arith.constant 0 : i32
    %c0_i32_0 = arith.constant 0 : i32
    %c0_i32_1 = arith.constant 0 : i32
    return %c0_i32, %c0_i32_0 : i32, i32
  }
  func.func @transform_3(%arg0: i32) -> (i32, i32) {
    %c0_i32 = arith.constant 0 : i32
    %c0_i32_0 = arith.constant 0 : i32
    %c0_i32_1 = arith.constant 0 : i32
    return %c0_i32, %c0_i32_0 : i32, i32
  }
  func.func @transform_4(%arg0: i32) -> (i32, i32, i32, i32) {
    %c0_i32 = arith.constant 0 : i32
    %c0_i32_0 = arith.constant 0 : i32
    %c0_i32_1 = arith.constant 0 : i32
    %c0_i32_2 = arith.constant 0 : i32
    return %arg0, %c0_i32, %c0_i32_0, %c0_i32_1 : i32, i32, i32, i32
  }
}

</mosaic_0001>

<llo_original>
// kernel: tpu_custom_call.1
$region0: #{tpu_custom_call.1}
  #allocation0 [shape = 'u32[]', space=smem, size = 0x4, offset = 0x4, fixed_abs, tag = 'smem constant byte address 0x4 - core index']
  #allocation1 [shape = 'u32[72,128]{1,0:T(1,128)}', space=vmem, size = 0x9000, scoped, tag = 'internal scratch']
  %s0 = inlined_call_operand.hbm [shape: bf16[2,6,64,128], index: 0, kind: input, shape index: {}]
  %s1 = inlined_call_operand.hbm [shape: bf16[3,128,128], index: 1, kind: input, shape index: {}]
  %s2 = inlined_call_operand.vmem [shape: f32[1,128], index: 2, kind: input, shape index: {}]
  %s3 = inlined_call_operand.vmem [shape: f32[1,128], index: 3, kind: input, shape index: {}]
  %s4 = inlined_call_operand.hbm [shape: bf16[2,4,64,128], index: 4, kind: output, shape index: {}]
  %s5 = sld [smem:[#allocation0]]
  $region57: #{tpu_custom_call.1} parent=0
    _
  %s7 = ssub.s32 1, %s5
  %s8 = scalar_select 0, %s7, %s5
  $region1: #{tpu_custom_call.1} parent=0
    #allocation2 [shape = 'u8[196608]{0}', space=vmem, size = 0x30000, scoped, tag = 'input window, operand 0']
    #allocation3 [shape = 's32[2]{0}', space=sflag, size = 0x8, scoped, tag = 'scoped memory for tpu_custom_call.1']
    #allocation4 [shape = 's32[2]{0}', space=sflag, size = 0x8, scoped, tag = 'scoped memory for tpu_custom_call.1']
    #allocation5 [shape = 'u8[98304]{0}', space=vmem, size = 0x18000, scoped, tag = 'input window, operand 1, single buffered']
    #allocation6 [shape = 's32[1]{0}', space=sflag, size = 0x4, scoped, tag = 'scoped memory for tpu_custom_call.1']
    #allocation7 [shape = 'u8[131072]{0}', space=vmem, size = 0x20000, scoped, tag = 'output window, operand 0']
    %9 = vsyncpa [#allocation3], 0
    %s10 = scalar_lea.sflag [#allocation3], 1
    %11 = vsyncpa %s10, 0
    %12 = vsyncpa [#allocation6], 0
    %13 = vsyncpa [#allocation4], 0
    %s14 = scalar_lea.sflag [#allocation4], 1
    %15 = vsyncpa %s14, 0
    loop: start=0, step=1, limit=4
    $region2: #{tpu_custom_call.1} parent=1 // loop_pre_header
      _
    $region3: #{tpu_custom_call.1} parent=1 // loop_header
      %s17 = sphi 0, %s21
      %p18 = scmp.ge.s32.totalorder %s17, 4
      %s27 = sphi 0, %s29
      %s30 = sphi 0, %s27
      %s31 = sphi 0, %s30
      %s47 = sphi 0, %s31
      %s51 = sphi 0, %s51
      %s53 = sphi 0, %s51
      %s54 = sphi 0, %s53
      %s68 = sphi 0, %s54
      %s72 = sphi 0, %s72
      %s74 = sphi 0, %s72
      %s75 = sphi 0, %s74
      %s89 = sphi 0, %s75
      %s93 = sphi 0, %s93
      %s95 = sphi 0, %s93
      %s96 = sphi 0, %s95
      %s110 = sphi 0, %s96
      %s116 = sphi 0, %s118
      %s119 = sphi 0, %s116
      %s120 = sphi 0, %s119
      %s136 = sphi 0, %s120
    $region4: #{tpu_custom_call.1} parent=1 // loop_header_branch
      %20 = sbr.rel (%p18) target = $region8
    $region5: #{tpu_custom_call.1} parent=1 // loop_body
      %s22 = ssub.s32 %s17, 1
      %s23 = ssub.s32 %s17, 2
      %s24 = sadd.s32 %s17, 1
      %s25 = ssub.s32 %s17, %s24
      %p26 = scmp.eq.s32.totalorder %s25, 0
      %s28 = sadd.s32 %s27, 1
      %s29 = scalar_select %p26, %s27, %s28
      %p32 = pneg %p26
      %p33 = scmp.eq.s32.totalorder %s17, 1
      %p34 = por %p32, %p33
      %p35 = scmp.ne.s32.totalorder %s27, %s30
      %p36 = scmp.eq.s32.totalorder %s17, 0
      %p37 = por %p35, %p36
      %p38 = scmp.ne.s32.totalorder %s27, %s30
      %p39 = scmp.eq.s32.totalorder %s22, 1
      %p40 = por %p38, %p39
      %p41 = scmp.ne.s32.totalorder %s30, %s31
      %p42 = scmp.eq.s32.totalorder %s22, 0
      %p43 = por %p41, %p42
      %p44 = scmp.ne.s32.totalorder %s30, %s31
      %p45 = scmp.eq.s32.totalorder %s23, 1
      %p46 = por %p44, %p45
      %p48 = scmp.ne.s32.totalorder %s31, %s47
      %p49 = scmp.eq.s32.totalorder %s23, 0
      %p50 = por %p48, %p49
      %s52 = sadd.s32 %s51, 1
      %p55 = scmp.eq.s32.totalorder %s17, 1
      %p56 = scmp.ne.s32.totalorder %s51, %s53
      %p57 = scmp.eq.s32.totalorder %s17, 0
      %p58 = por %p56, %p57
      %p59 = scmp.ne.s32.totalorder %s51, %s53
      %p60 = scmp.eq.s32.totalorder %s22, 1
      %p61 = por %p59, %p60
      %p62 = scmp.ne.s32.totalorder %s53, %s54
      %p63 = scmp.eq.s32.totalorder %s22, 0
      %p64 = por %p62, %p63
      %p65 = scmp.ne.s32.totalorder %s53, %s54
      %p66 = scmp.eq.s32.totalorder %s23, 1
      %p67 = por %p65, %p66
      %p69 = scmp.ne.s32.totalorder %s54, %s68
      %p70 = scmp.eq.s32.totalorder %s23, 0
      %p71 = por %p69, %p70
      %s73 = sadd.s32 %s72, 1
      %p76 = scmp.eq.s32.totalorder %s17, 1
      %p77 = scmp.ne.s32.totalorder %s72, %s74
      %p78 = scmp.eq.s32.totalorder %s17, 0
      %p79 = por %p77, %p78
      %p80 = scmp.ne.s32.totalorder %s72, %s74
      %p81 = scmp.eq.s32.totalorder %s22, 1
      %p82 = por %p80, %p81
      %p83 = scmp.ne.s32.totalorder %s74, %s75
      %p84 = scmp.eq.s32.totalorder %s22, 0
      %p85 = por %p83, %p84
      %p86 = scmp.ne.s32.totalorder %s74, %s75
      %p87 = scmp.eq.s32.totalorder %s23, 1
      %p88 = por %p86, %p87
      %p90 = scmp.ne.s32.totalorder %s75, %s89
      %p91 = scmp.eq.s32.totalorder %s23, 0
      %p92 = por %p90, %p91
      %s94 = sadd.s32 %s93, 1
      %p97 = scmp.eq.s32.totalorder %s17, 1
      %p98 = scmp.ne.s32.totalorder %s93, %s95
      %p99 = scmp.eq.s32.totalorder %s17, 0
      %p100 = por %p98, %p99
      %p101 = scmp.ne.s32.totalorder %s93, %s95
      %p102 = scmp.eq.s32.totalorder %s22, 1
      %p103 = por %p101, %p102
      %p104 = scmp.ne.s32.totalorder %s95, %s96
      %p105 = scmp.eq.s32.totalorder %s22, 0
      %p106 = por %p104, %p105
      %p107 = scmp.ne.s32.totalorder %s95, %s96
      %p108 = scmp.eq.s32.totalorder %s23, 1
      %p109 = por %p107, %p108
      %p111 = scmp.ne.s32.totalorder %s96, %s110
      %p112 = scmp.eq.s32.totalorder %s23, 0
      %p113 = por %p111, %p112
      %s114 = ssub.s32 %s17, %s24
      %p115 = scmp.eq.s32.totalorder %s114, 0
      %s117 = sadd.s32 %s116, 1
      %s118 = scalar_select %p115, %s116, %s117
      %p121 = pneg %p115
      %p122 = scmp.eq.s32.totalorder %s17, 1
      %p123 = por %p121, %p122
      %p124 = scmp.ne.s32.totalorder %s116, %s119
      %p125 = scmp.eq.s32.totalorder %s17, 0
      %p126 = por %p124, %p125
      %p127 = scmp.ne.s32.totalorder %s116, %s119
      %p128 = scmp.eq.s32.totalorder %s22, 1
      %p129 = por %p127, %p128
      %p130 = scmp.ne.s32.totalorder %s119, %s120
      %p131 = scmp.eq.s32.totalorder %s22, 0
      %p132 = por %p130, %p131
      %p133 = scmp.ne.s32.totalorder %s119, %s120
      %p134 = scmp.eq.s32.totalorder %s23, 1
      %p135 = por %p133, %p134
      %p137 = scmp.ne.s32.totalorder %s120, %s136
      %p138 = scmp.eq.s32.totalorder %s23, 0
      %p139 = por %p137, %p138
      %p140 = scmp.le.s32.totalorder 1, %s17
      %p141 = scmp.lt.s32.totalorder %s17, 3
      %p142 = pnand %p140, %p141
      %p143 = pneg %p142
      // Predicated region
      $region9: #{tpu_custom_call.1} parent=5 // pred_check
        _
      $region10: #{tpu_custom_call.1} parent=5 // pred_check_branch
        %145 = sbr.rel (%p142) target = $region12
      $region11: #{tpu_custom_call.1} parent=5 // pred_region
        %s146 = ssub.s32 %s17, 1
        // Predicated region
        $region13: #{tpu_custom_call.1} parent=11 // pred_check
          %p147 = pneg %p64
        $region14: #{tpu_custom_call.1} parent=11 // pred_check_branch
          %149 = sbr.rel (%p147) target = $region16
        $region15: #{tpu_custom_call.1} parent=11 // pred_region
          %151 = vsyncadd [#allocation6], 0
          %s152 = sshll.u32 %s1, 4
          %s153 = int_to_ptr.hbm [resolvable:$true] %s152
          %s154 = sshll.u32 [#allocation5], 4
          %s155 = int_to_ptr.vmem [resolvable:$true] %s154
          %160 = dma.hbm_to_vmem [thread:$0]  %s153, 3072, %s155, [#allocation6], 64, 64, 4
        $region16: #{tpu_custom_call.1} parent=11 // pred_fallthru
          _
        // Predicated region
        $region17: #{tpu_custom_call.1} parent=11 // pred_check
          %p161 = pneg %p85
        $region18: #{tpu_custom_call.1} parent=11 // pred_check_branch
          %163 = sbr.rel (%p161) target = $region20
        $region19: #{tpu_custom_call.1} parent=11 // pred_region
          _
        $region20: #{tpu_custom_call.1} parent=11 // pred_fallthru
          _
        // Predicated region
        $region21: #{tpu_custom_call.1} parent=11 // pred_check
          %p164 = pneg %p106
        $region22: #{tpu_custom_call.1} parent=11 // pred_check_branch
          %166 = sbr.rel (%p164) target = $region24
        $region23: #{tpu_custom_call.1} parent=11 // pred_region
          _
        $region24: #{tpu_custom_call.1} parent=11 // pred_fallthru
          _
      $region12: #{tpu_custom_call.1} parent=5 // pred_fallthru
        _
      %p167 = scmp.lt.s32.totalorder %s17, 2
      // Predicated region
      $region25: #{tpu_custom_call.1} parent=5 // pred_check
        %p168 = pneg %p167
      $region26: #{tpu_custom_call.1} parent=5 // pred_check_branch
        %170 = sbr.rel (%p168) target = $region28
      $region27: #{tpu_custom_call.1} parent=5 // pred_region
        // Predicated region
        $region29: #{tpu_custom_call.1} parent=27 // pred_check
          %p171 = pneg %p37
        $region30: #{tpu_custom_call.1} parent=27 // pred_check_branch
          %173 = sbr.rel (%p171) target = $region32
        $region31: #{tpu_custom_call.1} parent=27 // pred_region
          %s174 = sand.u32 %s27, 1
          %s175 = scalar_lea.sflag [#allocation3], %s174
          %s176 = sand.u32 %s27, 1
          %s177 = smul.addr %s176, 192
          %s178 = scalar_lea.vmem [#allocation2], %s177
          %180 = vsyncadd %s175, 0
          %s181 = smul.addr %s17, 48
          %s182 = smul.addr %s181, 4
          %s183 = scalar_lea.hbm %s0, %s182
          %s184 = sshll.u32 %s183, 4
          %s185 = int_to_ptr.hbm [resolvable:$true] %s184
          %s186 = sshll.u32 %s178, 4
          %s187 = int_to_ptr.vmem [resolvable:$true] %s186
          %192 = dma.hbm_to_vmem [thread:$0]  %s185, 3072, %s187, %s175, 64, 64, 4
        $region32: #{tpu_custom_call.1} parent=27 // pred_fallthru
          _
      $region28: #{tpu_custom_call.1} parent=5 // pred_fallthru
        _
      %p193 = scmp.le.s32.totalorder 1, %s17
      %p194 = scmp.lt.s32.totalorder %s17, 3
      %p195 = pnand %p193, %p194
      %p196 = pneg %p195
      // Predicated region
      $region33: #{tpu_custom_call.1} parent=5 // pred_check
        _
      $region34: #{tpu_custom_call.1} parent=5 // pred_check_branch
        %198 = sbr.rel (%p195) target = $region36
      $region35: #{tpu_custom_call.1} parent=5 // pred_region
        %s199 = ssub.s32 %s17, 1
        %s200 = sand.u32 %s30, 1
        %s201 = scalar_lea.sflag [#allocation3], %s200
        %s202 = sand.u32 %s30, 1
        %s203 = smul.addr %s202, 192
        %s204 = scalar_lea.vmem [#allocation2], %s203
        // Predicated region
        $region37: #{tpu_custom_call.1} parent=35 // pred_check
          %p205 = pneg %p43
        $region38: #{tpu_custom_call.1} parent=35 // pred_check_branch
          %207 = sbr.rel (%p205) target = $region40
        $region39: #{tpu_custom_call.1} parent=35 // pred_region
          %209 = dma.done %s201, 3072
        $region40: #{tpu_custom_call.1} parent=35 // pred_fallthru
          _
        // Predicated region
        $region41: #{tpu_custom_call.1} parent=35 // pred_check
          %p210 = pneg %p64
        $region42: #{tpu_custom_call.1} parent=35 // pred_check_branch
          %212 = sbr.rel (%p210) target = $region44
        $region43: #{tpu_custom_call.1} parent=35 // pred_region
          %214 = dma.done [#allocation6], 3072
        $region44: #{tpu_custom_call.1} parent=35 // pred_fallthru
          _
        %s215 = sand.u32 %s30, 1
        %s216 = scalar_lea.sflag [#allocation3], %s215
        %s217 = sand.u32 %s30, 1
        %s218 = smul.addr %s217, 192
        %s219 = scalar_lea.vmem [#allocation2], %s218
        %p220 = pneg %p43
        %p221 = pneg %p40
        %p222 = pneg %p64
        %p223 = pneg %p61
        %p224 = pneg %p85
        %p225 = pneg %p82
        %p226 = pneg %p106
        %p227 = pneg %p103
        %p228 = pneg %p132
        %p229 = pneg %p129
        %s230 = sand.u32 %s119, 1
        %s231 = scalar_lea.sflag [#allocation4], %s230
        %s232 = sand.u32 %s119, 1
        %s233 = smul.addr %s232, 128
        %s234 = scalar_lea.vmem [#allocation7], %s233
        %v235 = vld [vmem:[%s204] sm:$0xf]
        %v236 = vld [vmem:[%s204 + $0x4] sm:$0xf]
        %v237 = vld [vmem:[%s204 + $0x8] sm:$0xf]
        %v238 = vld [vmem:[%s204 + $0xc] sm:$0xf]
        %v239 = vld [vmem:[%s204 + $0x10] sm:$0xf]
        %v240 = vld [vmem:[%s204 + $0x14] sm:$0xf]
        %v241 = vld [vmem:[%s204 + $0x18] sm:$0xf]
        %v242 = vld [vmem:[%s204 + $0x1c] sm:$0xf]
        %v243 = vld [vmem:[%s204 + $0x20] sm:$0xf]
        %v244 = vld [vmem:[%s204 + $0x24] sm:$0xf]
        %v245 = vld [vmem:[%s204 + $0x28] sm:$0xf]
        %v246 = vld [vmem:[%s204 + $0x2c] sm:$0xf]
        %v247 = vld [vmem:[%s204 + $0x30] sm:$0xf]
        %v248 = vld [vmem:[%s204 + $0x34] sm:$0xf]
        %v249 = vld [vmem:[%s204 + $0x38] sm:$0xf]
        %v250 = vld [vmem:[%s204 + $0x3c] sm:$0xf]
        %v251 = vld [vmem:[%s204 + $0x40] sm:$0xf]
        %v252 = vld [vmem:[%s204 + $0x44] sm:$0xf]
        %v253 = vld [vmem:[%s204 + $0x48] sm:$0xf]
        %v254 = vld [vmem:[%s204 + $0x4c] sm:$0xf]
        %v255 = vld [vmem:[%s204 + $0x50] sm:$0xf]
        %v256 = vld [vmem:[%s204 + $0x54] sm:$0xf]
        %v257 = vld [vmem:[%s204 + $0x58] sm:$0xf]
        %v258 = vld [vmem:[%s204 + $0x5c] sm:$0xf]
        %v259 = vld [vmem:[%s204 + $0x60] sm:$0xf]
        %v260 = vld [vmem:[%s204 + $0x64] sm:$0xf]
        %v261 = vld [vmem:[%s204 + $0x68] sm:$0xf]
        %v262 = vld [vmem:[%s204 + $0x6c] sm:$0xf]
        %v263 = vld [vmem:[%s204 + $0x70] sm:$0xf]
        %v264 = vld [vmem:[%s204 + $0x74] sm:$0xf]
        %v265 = vld [vmem:[%s204 + $0x78] sm:$0xf]
        %v266 = vld [vmem:[%s204 + $0x7c] sm:$0xf]
        %v267 = vld [vmem:[#allocation5] sm:$0xf]
        %v268 = vld [vmem:[#allocation5 + $0x4] sm:$0xf]
        %v269 = vld [vmem:[#allocation5 + $0x8] sm:$0xf]
        %v270 = vld [vmem:[#allocation5 + $0xc] sm:$0xf]
        %v271 = vld [vmem:[#allocation5 + $0x10] sm:$0xf]
        %v272 = vld [vmem:[#allocation5 + $0x14] sm:$0xf]
        %v273 = vld [vmem:[#allocation5 + $0x18] sm:$0xf]
        %v274 = vld [vmem:[#allocation5 + $0x1c] sm:$0xf]
        %v275 = vld [vmem:[#allocation5 + $0x20] sm:$0xf]
        %v276 = vld [vmem:[#allocation5 + $0x24] sm:$0xf]
        %v277 = vld [vmem:[#allocation5 + $0x28] sm:$0xf]
        %v278 = vld [vmem:[#allocation5 + $0x2c] sm:$0xf]
        %v279 = vld [vmem:[#allocation5 + $0x30] sm:$0xf]
        %v280 = vld [vmem:[#allocation5 + $0x34] sm:$0xf]
        %v281 = vld [vmem:[#allocation5 + $0x38] sm:$0xf]
        %v282 = vld [vmem:[#allocation5 + $0x3c] sm:$0xf]
        %s283 = scalar_lea.vmem %s204, 32 [#allocation2]
        %v284 = vld [vmem:[%s283] sm:$0xf]
        %v285 = vld [vmem:[%s283 + $0x4] sm:$0xf]
        %v286 = vld [vmem:[%s283 + $0x8] sm:$0xf]
        %v287 = vld [vmem:[%s283 + $0xc] sm:$0xf]
        %v288 = vld [vmem:[%s283 + $0x10] sm:$0xf]
        %v289 = vld [vmem:[%s283 + $0x14] sm:$0xf]
        %v290 = vld [vmem:[%s283 + $0x18] sm:$0xf]
        %v291 = vld [vmem:[%s283 + $0x1c] sm:$0xf]
        %v292 = vld [vmem:[%s283 + $0x20] sm:$0xf]
        %v293 = vld [vmem:[%s283 + $0x24] sm:$0xf]
        %v294 = vld [vmem:[%s283 + $0x28] sm:$0xf]
        %v295 = vld [vmem:[%s283 + $0x2c] sm:$0xf]
        %v296 = vld [vmem:[%s283 + $0x30] sm:$0xf]
        %v297 = vld [vmem:[%s283 + $0x34] sm:$0xf]
        %v298 = vld [vmem:[%s283 + $0x38] sm:$0xf]
        %v299 = vld [vmem:[%s283 + $0x3c] sm:$0xf]
        %v300 = vld [vmem:[%s283 + $0x40] sm:$0xf]
        %v301 = vld [vmem:[%s283 + $0x44] sm:$0xf]
        %v302 = vld [vmem:[%s283 + $0x48] sm:$0xf]
        %v303 = vld [vmem:[%s283 + $0x4c] sm:$0xf]
        %v304 = vld [vmem:[%s283 + $0x50] sm:$0xf]
        %v305 = vld [vmem:[%s283 + $0x54] sm:$0xf]
        %v306 = vld [vmem:[%s283 + $0x58] sm:$0xf]
        %v307 = vld [vmem:[%s283 + $0x5c] sm:$0xf]
        %v308 = vld [vmem:[%s283 + $0x60] sm:$0xf]
        %v309 = vld [vmem:[%s283 + $0x64] sm:$0xf]
        %v310 = vld [vmem:[%s283 + $0x68] sm:$0xf]
        %v311 = vld [vmem:[%s283 + $0x6c] sm:$0xf]
        %v312 = vld [vmem:[%s283 + $0x70] sm:$0xf]
        %v313 = vld [vmem:[%s283 + $0x74] sm:$0xf]
        %v314 = vld [vmem:[%s283 + $0x78] sm:$0xf]
        %v315 = vld [vmem:[%s283 + $0x7c] sm:$0xf]
        %s316 = scalar_lea.vmem [#allocation5], 64
        %v317 = vld [vmem:[%s316] sm:$0xf]
        %v318 = vld [vmem:[%s316 + $0x4] sm:$0xf]
        %v319 = vld [vmem:[%s316 + $0x8] sm:$0xf]
        %v320 = vld [vmem:[%s316 + $0xc] sm:$0xf]
        %v321 = vld [vmem:[%s316 + $0x10] sm:$0xf]
        %v322 = vld [vmem:[%s316 + $0x14] sm:$0xf]
        %v323 = vld [vmem:[%s316 + $0x18] sm:$0xf]
        %v324 = vld [vmem:[%s316 + $0x1c] sm:$0xf]
        %v325 = vld [vmem:[%s316 + $0x20] sm:$0xf]
        %v326 = vld [vmem:[%s316 + $0x24] sm:$0xf]
        %v327 = vld [vmem:[%s316 + $0x28] sm:$0xf]
        %v328 = vld [vmem:[%s316 + $0x2c] sm:$0xf]
        %v329 = vld [vmem:[%s316 + $0x30] sm:$0xf]
        %v330 = vld [vmem:[%s316 + $0x34] sm:$0xf]
        %v331 = vld [vmem:[%s316 + $0x38] sm:$0xf]
        %v332 = vld [vmem:[%s316 + $0x3c] sm:$0xf]
        %v365 = vunpack.c.l.b16 %v284
        %v366 = vunpack.c.l.b16 %v285
        %v367 = vunpack.c.l.b16 %v286
        %v368 = vunpack.c.l.b16 %v287
        %v369 = vunpack.c.l.b16 %v288
        %v370 = vunpack.c.l.b16 %v289
        %v371 = vunpack.c.l.b16 %v290
        %v372 = vunpack.c.l.b16 %v291
        %v373 = vunpack.c.l.b16 %v292
        %v374 = vunpack.c.l.b16 %v293
        %v375 = vunpack.c.l.b16 %v294
        %v376 = vunpack.c.l.b16 %v295
        %v377 = vunpack.c.l.b16 %v296
        %v378 = vunpack.c.l.b16 %v297
        %v379 = vunpack.c.l.b16 %v298
        %v380 = vunpack.c.l.b16 %v299
        %v381 = vunpack.c.l.b16 %v300
        %v382 = vunpack.c.l.b16 %v301
        %v383 = vunpack.c.l.b16 %v302
        %v384 = vunpack.c.l.b16 %v303
        %v385 = vunpack.c.l.b16 %v304
        %v386 = vunpack.c.l.b16 %v305
        %v387 = vunpack.c.l.b16 %v306
        %v388 = vunpack.c.l.b16 %v307
        %v389 = vunpack.c.l.b16 %v308
        %v390 = vunpack.c.l.b16 %v309
        %v391 = vunpack.c.l.b16 %v310
        %v392 = vunpack.c.l.b16 %v311
        %v393 = vunpack.c.l.b16 %v312
        %v394 = vunpack.c.l.b16 %v313
        %v395 = vunpack.c.l.b16 %v314
        %v396 = vunpack.c.l.b16 %v315
        %v397 = vpack.c.b16 %v366, %v365
        %v398 = vpack.c.b16 %v368, %v367
        %v399 = vpack.c.b16 %v370, %v369
        %v400 = vpack.c.b16 %v372, %v371
        %v401 = vpack.c.b16 %v374, %v373
        %v402 = vpack.c.b16 %v376, %v375
        %v403 = vpack.c.b16 %v378, %v377
        %v404 = vpack.c.b16 %v380, %v379
        %v405 = vpack.c.b16 %v382, %v381
        %v406 = vpack.c.b16 %v384, %v383
        %v407 = vpack.c.b16 %v386, %v385
        %v408 = vpack.c.b16 %v388, %v387
        %v409 = vpack.c.b16 %v390, %v389
        %v410 = vpack.c.b16 %v392, %v391
        %v411 = vpack.c.b16 %v394, %v393
        %v412 = vpack.c.b16 %v396, %v395
        %v445 = vunpack.c.l.b16 %v317
        %v446 = vunpack.c.l.b16 %v318
        %v447 = vunpack.c.l.b16 %v319
        %v448 = vunpack.c.l.b16 %v320
        %v449 = vunpack.c.l.b16 %v321
        %v450 = vunpack.c.l.b16 %v322
        %v451 = vunpack.c.l.b16 %v323
        %v452 = vunpack.c.l.b16 %v324
        %v453 = vunpack.c.l.b16 %v325
        %v454 = vunpack.c.l.b16 %v326
        %v455 = vunpack.c.l.b16 %v327
        %v456 = vunpack.c.l.b16 %v328
        %v457 = vunpack.c.l.b16 %v329
        %v458 = vunpack.c.l.b16 %v330
        %v459 = vunpack.c.l.b16 %v331
        %v460 = vunpack.c.l.b16 %v332
        %v461 = vpack.c.b16 %v446, %v445
        %v462 = vpack.c.b16 %v448, %v447
        %v463 = vpack.c.b16 %v450, %v449
        %v464 = vpack.c.b16 %v452, %v451
        %v465 = vpack.c.b16 %v454, %v453
        %v466 = vpack.c.b16 %v456, %v455
        %v467 = vpack.c.b16 %v458, %v457
        %v468 = vpack.c.b16 %v460, %v459
        %477 = vmatpush.bf16.msra.mxu0 %v468
        %478 = vmatpush.bf16.msra.mxu0 %v467
        %479 = vmatpush.bf16.msra.mxu0 %v466
        %480 = vmatpush.bf16.msra.mxu0 %v465
        %481 = vmatpush.bf16.msra.mxu0 %v464
        %482 = vmatpush.bf16.msra.mxu0 %v463
        %483 = vmatpush.bf16.msra.mxu0 %v462
        %484 = vmatpush.bf16.msra.mxu0 %v461
        %485 = vmatmul.bf16.gmra.mxu0 %v397
        %v486 = vpop.f32.mrf.mxu0
        %v487 = vadd.f32 0.0, %v486
        %v488 = vpop.f32.mrf.mxu0
        %v489 = vadd.f32 0.0, %v488
        %490 = vmatmul.bf16.gmra.mxu0 %v398
        %v491 = vpop.f32.mrf.mxu0
        %v492 = vadd.f32 0.0, %v491
        %v493 = vpop.f32.mrf.mxu0
        %v494 = vadd.f32 0.0, %v493
        %495 = vmatmul.bf16.gmra.mxu0 %v399
        %v496 = vpop.f32.mrf.mxu0
        %v497 = vadd.f32 0.0, %v496
        %v498 = vpop.f32.mrf.mxu0
        %v499 = vadd.f32 0.0, %v498
        %500 = vmatmul.bf16.gmra.mxu0 %v400
        %v501 = vpop.f32.mrf.mxu0
        %v502 = vadd.f32 0.0, %v501
        %v503 = vpop.f32.mrf.mxu0
        %v504 = vadd.f32 0.0, %v503
        %505 = vmatmul.bf16.gmra.mxu0 %v401
        %v506 = vpop.f32.mrf.mxu0
        %v507 = vadd.f32 0.0, %v506
        %v508 = vpop.f32.mrf.mxu0
        %v509 = vadd.f32 0.0, %v508
        %510 = vmatmul.bf16.gmra.mxu0 %v402
        %v511 = vpop.f32.mrf.mxu0
        %v512 = vadd.f32 0.0, %v511
        %v513 = vpop.f32.mrf.mxu0
        %v514 = vadd.f32 0.0, %v513
        %515 = vmatmul.bf16.gmra.mxu0 %v403
        %v516 = vpop.f32.mrf.mxu0
        %v517 = vadd.f32 0.0, %v516
        %v518 = vpop.f32.mrf.mxu0
        %v519 = vadd.f32 0.0, %v518
        %520 = vmatmul.bf16.gmra.mxu0 %v404
        %v521 = vpop.f32.mrf.mxu0
        %v522 = vadd.f32 0.0, %v521
        %v523 = vpop.f32.mrf.mxu0
        %v524 = vadd.f32 0.0, %v523
        %525 = vmatmul.bf16.gmra.mxu0 %v405
        %v526 = vpop.f32.mrf.mxu0
        %v527 = vadd.f32 0.0, %v526
        %v528 = vpop.f32.mrf.mxu0
        %v529 = vadd.f32 0.0, %v528
        %530 = vmatmul.bf16.gmra.mxu0 %v406
        %v531 = vpop.f32.mrf.mxu0
        %v532 = vadd.f32 0.0, %v531
        %v533 = vpop.f32.mrf.mxu0
        %v534 = vadd.f32 0.0, %v533
        %535 = vmatmul.bf16.gmra.mxu0 %v407
        %v536 = vpop.f32.mrf.mxu0
        %v537 = vadd.f32 0.0, %v536
        %v538 = vpop.f32.mrf.mxu0
        %v539 = vadd.f32 0.0, %v538
        %540 = vmatmul.bf16.gmra.mxu0 %v408
        %v541 = vpop.f32.mrf.mxu0
        %v542 = vadd.f32 0.0, %v541
        %v543 = vpop.f32.mrf.mxu0
        %v544 = vadd.f32 0.0, %v543
        %545 = vmatmul.bf16.gmra.mxu0 %v409
        %v546 = vpop.f32.mrf.mxu0
        %v547 = vadd.f32 0.0, %v546
        %v548 = vpop.f32.mrf.mxu0
        %v549 = vadd.f32 0.0, %v548
        %550 = vmatmul.bf16.gmra.mxu0 %v410
        %v551 = vpop.f32.mrf.mxu0
        %v552 = vadd.f32 0.0, %v551
        %v553 = vpop.f32.mrf.mxu0
        %v554 = vadd.f32 0.0, %v553
        %555 = vmatmul.bf16.gmra.mxu0 %v411
        %v556 = vpop.f32.mrf.mxu0
        %v557 = vadd.f32 0.0, %v556
        %v558 = vpop.f32.mrf.mxu0
        %v559 = vadd.f32 0.0, %v558
        %560 = vmatmul.bf16.gmra.mxu0 %v412
        %v561 = vpop.f32.mrf.mxu0
        %v562 = vadd.f32 0.0, %v561
        %v563 = vpop.f32.mrf.mxu0
        %v564 = vadd.f32 0.0, %v563
        %565 = vdwg.mxu0
        %v598 = vunpack.c.l.b16 %v235
        %v599 = vunpack.c.l.b16 %v236
        %v600 = vunpack.c.l.b16 %v237
        %v601 = vunpack.c.l.b16 %v238
        %v602 = vunpack.c.l.b16 %v239
        %v603 = vunpack.c.l.b16 %v240
        %v604 = vunpack.c.l.b16 %v241
        %v605 = vunpack.c.l.b16 %v242
        %v606 = vunpack.c.l.b16 %v243
        %v607 = vunpack.c.l.b16 %v244
        %v608 = vunpack.c.l.b16 %v245
        %v609 = vunpack.c.l.b16 %v246
        %v610 = vunpack.c.l.b16 %v247
        %v611 = vunpack.c.l.b16 %v248
        %v612 = vunpack.c.l.b16 %v249
        %v613 = vunpack.c.l.b16 %v250
        %v614 = vunpack.c.l.b16 %v251
        %v615 = vunpack.c.l.b16 %v252
        %v616 = vunpack.c.l.b16 %v253
        %v617 = vunpack.c.l.b16 %v254
        %v618 = vunpack.c.l.b16 %v255
        %v619 = vunpack.c.l.b16 %v256
        %v620 = vunpack.c.l.b16 %v257
        %v621 = vunpack.c.l.b16 %v258
        %v622 = vunpack.c.l.b16 %v259
        %v623 = vunpack.c.l.b16 %v260
        %v624 = vunpack.c.l.b16 %v261
        %v625 = vunpack.c.l.b16 %v262
        %v626 = vunpack.c.l.b16 %v263
        %v627 = vunpack.c.l.b16 %v264
        %v628 = vunpack.c.l.b16 %v265
        %v629 = vunpack.c.l.b16 %v266
        %v630 = vpack.c.b16 %v599, %v598
        %v631 = vpack.c.b16 %v601, %v600
        %v632 = vpack.c.b16 %v603, %v602
        %v633 = vpack.c.b16 %v605, %v604
        %v634 = vpack.c.b16 %v607, %v606
        %v635 = vpack.c.b16 %v609, %v608
        %v636 = vpack.c.b16 %v611, %v610
        %v637 = vpack.c.b16 %v613, %v612
        %v638 = vpack.c.b16 %v615, %v614
        %v639 = vpack.c.b16 %v617, %v616
        %v640 = vpack.c.b16 %v619, %v618
        %v641 = vpack.c.b16 %v621, %v620
        %v642 = vpack.c.b16 %v623, %v622
        %v643 = vpack.c.b16 %v625, %v624
        %v644 = vpack.c.b16 %v627, %v626
        %v645 = vpack.c.b16 %v629, %v628
        %v678 = vunpack.c.l.b16 %v267
        %v679 = vunpack.c.l.b16 %v268
        %v680 = vunpack.c.l.b16 %v269
        %v681 = vunpack.c.l.b16 %v270
        %v682 = vunpack.c.l.b16 %v271
        %v683 = vunpack.c.l.b16 %v272
        %v684 = vunpack.c.l.b16 %v273
        %v685 = vunpack.c.l.b16 %v274
        %v686 = vunpack.c.l.b16 %v275
        %v687 = vunpack.c.l.b16 %v276
        %v688 = vunpack.c.l.b16 %v277
        %v689 = vunpack.c.l.b16 %v278
        %v690 = vunpack.c.l.b16 %v279
        %v691 = vunpack.c.l.b16 %v280
        %v692 = vunpack.c.l.b16 %v281
        %v693 = vunpack.c.l.b16 %v282
        %v694 = vpack.c.b16 %v679, %v678
        %v695 = vpack.c.b16 %v681, %v680
        %v696 = vpack.c.b16 %v683, %v682
        %v697 = vpack.c.b16 %v685, %v684
        %v698 = vpack.c.b16 %v687, %v686
        %v699 = vpack.c.b16 %v689, %v688
        %v700 = vpack.c.b16 %v691, %v690
        %v701 = vpack.c.b16 %v693, %v692
        %710 = vmatpush.bf16.msra.mxu0 %v701
        %711 = vmatpush.bf16.msra.mxu0 %v700
        %712 = vmatpush.bf16.msra.mxu0 %v699
        %713 = vmatpush.bf16.msra.mxu0 %v698
        %714 = vmatpush.bf16.msra.mxu0 %v697
        %715 = vmatpush.bf16.msra.mxu0 %v696
        %716 = vmatpush.bf16.msra.mxu0 %v695
        %717 = vmatpush.bf16.msra.mxu0 %v694
        %718 = vmatmul.bf16.gmra.mxu0 %v630
        %v719 = vpop.f32.mrf.mxu0
        %v720 = vadd.f32 %v487, %v719
        %v721 = vpop.f32.mrf.mxu0
        %v722 = vadd.f32 %v489, %v721
        %723 = vmatmul.bf16.gmra.mxu0 %v631
        %v724 = vpop.f32.mrf.mxu0
        %v725 = vadd.f32 %v492, %v724
        %v726 = vpop.f32.mrf.mxu0
        %v727 = vadd.f32 %v494, %v726
        %728 = vmatmul.bf16.gmra.mxu0 %v632
        %v729 = vpop.f32.mrf.mxu0
        %v730 = vadd.f32 %v497, %v729
        %v731 = vpop.f32.mrf.mxu0
        %v732 = vadd.f32 %v499, %v731
        %733 = vmatmul.bf16.gmra.mxu0 %v633
        %v734 = vpop.f32.mrf.mxu0
        %v735 = vadd.f32 %v502, %v734
        %v736 = vpop.f32.mrf.mxu0
        %v737 = vadd.f32 %v504, %v736
        %738 = vmatmul.bf16.gmra.mxu0 %v634
        %v739 = vpop.f32.mrf.mxu0
        %v740 = vadd.f32 %v507, %v739
        %v741 = vpop.f32.mrf.mxu0
        %v742 = vadd.f32 %v509, %v741
        %743 = vmatmul.bf16.gmra.mxu0 %v635
        %v744 = vpop.f32.mrf.mxu0
        %v745 = vadd.f32 %v512, %v744
        %v746 = vpop.f32.mrf.mxu0
        %v747 = vadd.f32 %v514, %v746
        %748 = vmatmul.bf16.gmra.mxu0 %v636
        %v749 = vpop.f32.mrf.mxu0
        %v750 = vadd.f32 %v517, %v749
        %v751 = vpop.f32.mrf.mxu0
        %v752 = vadd.f32 %v519, %v751
        %753 = vmatmul.bf16.gmra.mxu0 %v637
        %v754 = vpop.f32.mrf.mxu0
        %v755 = vadd.f32 %v522, %v754
        %v756 = vpop.f32.mrf.mxu0
        %v757 = vadd.f32 %v524, %v756
        %758 = vmatmul.bf16.gmra.mxu0 %v638
        %v759 = vpop.f32.mrf.mxu0
        %v760 = vadd.f32 %v527, %v759
        %v761 = vpop.f32.mrf.mxu0
        %v762 = vadd.f32 %v529, %v761
        %763 = vmatmul.bf16.gmra.mxu0 %v639
        %v764 = vpop.f32.mrf.mxu0
        %v765 = vadd.f32 %v532, %v764
        %v766 = vpop.f32.mrf.mxu0
        %v767 = vadd.f32 %v534, %v766
        %768 = vmatmul.bf16.gmra.mxu0 %v640
        %v769 = vpop.f32.mrf.mxu0
        %v770 = vadd.f32 %v537, %v769
        %v771 = vpop.f32.mrf.mxu0
        %v772 = vadd.f32 %v539, %v771
        %773 = vmatmul.bf16.gmra.mxu0 %v641
        %v774 = vpop.f32.mrf.mxu0
        %v775 = vadd.f32 %v542, %v774
        %v776 = vpop.f32.mrf.mxu0
        %v777 = vadd.f32 %v544, %v776
        %778 = vmatmul.bf16.gmra.mxu0 %v642
        %v779 = vpop.f32.mrf.mxu0
        %v780 = vadd.f32 %v547, %v779
        %v781 = vpop.f32.mrf.mxu0
        %v782 = vadd.f32 %v549, %v781
        %783 = vmatmul.bf16.gmra.mxu0 %v643
        %v784 = vpop.f32.mrf.mxu0
        %v785 = vadd.f32 %v552, %v784
        %v786 = vpop.f32.mrf.mxu0
        %v787 = vadd.f32 %v554, %v786
        %788 = vmatmul.bf16.gmra.mxu0 %v644
        %v789 = vpop.f32.mrf.mxu0
        %v790 = vadd.f32 %v557, %v789
        %v791 = vpop.f32.mrf.mxu0
        %v792 = vadd.f32 %v559, %v791
        %793 = vmatmul.bf16.gmra.mxu0 %v645
        %v794 = vpop.f32.mrf.mxu0
        %v795 = vadd.f32 %v562, %v794
        %v796 = vpop.f32.mrf.mxu0
        %v797 = vadd.f32 %v564, %v796
        %798 = vdwg.mxu0
        %s799 = scalar_lea.vmem %s204, 64 [#allocation2]
        %v800 = vld [vmem:[%s799] sm:$0xf]
        %v801 = vld [vmem:[%s799 + $0x4] sm:$0xf]
        %v802 = vld [vmem:[%s799 + $0x8] sm:$0xf]
        %v803 = vld [vmem:[%s799 + $0xc] sm:$0xf]
        %v804 = vld [vmem:[%s799 + $0x10] sm:$0xf]
        %v805 = vld [vmem:[%s799 + $0x14] sm:$0xf]
        %v806 = vld [vmem:[%s799 + $0x18] sm:$0xf]
        %v807 = vld [vmem:[%s799 + $0x1c] sm:$0xf]
        %v808 = vld [vmem:[%s799 + $0x20] sm:$0xf]
        %v809 = vld [vmem:[%s799 + $0x24] sm:$0xf]
        %v810 = vld [vmem:[%s799 + $0x28] sm:$0xf]
        %v811 = vld [vmem:[%s799 + $0x2c] sm:$0xf]
        %v812 = vld [vmem:[%s799 + $0x30] sm:$0xf]
        %v813 = vld [vmem:[%s799 + $0x34] sm:$0xf]
        %v814 = vld [vmem:[%s799 + $0x38] sm:$0xf]
        %v815 = vld [vmem:[%s799 + $0x3c] sm:$0xf]
        %v816 = vld [vmem:[%s799 + $0x40] sm:$0xf]
        %v817 = vld [vmem:[%s799 + $0x44] sm:$0xf]
        %v818 = vld [vmem:[%s799 + $0x48] sm:$0xf]
        %v819 = vld [vmem:[%s799 + $0x4c] sm:$0xf]
        %v820 = vld [vmem:[%s799 + $0x50] sm:$0xf]
        %v821 = vld [vmem:[%s799 + $0x54] sm:$0xf]
        %v822 = vld [vmem:[%s799 + $0x58] sm:$0xf]
        %v823 = vld [vmem:[%s799 + $0x5c] sm:$0xf]
        %v824 = vld [vmem:[%s799 + $0x60] sm:$0xf]
        %v825 = vld [vmem:[%s799 + $0x64] sm:$0xf]
        %v826 = vld [vmem:[%s799 + $0x68] sm:$0xf]
        %v827 = vld [vmem:[%s799 + $0x6c] sm:$0xf]
        %v828 = vld [vmem:[%s799 + $0x70] sm:$0xf]
        %v829 = vld [vmem:[%s799 + $0x74] sm:$0xf]
        %v830 = vld [vmem:[%s799 + $0x78] sm:$0xf]
        %v831 = vld [vmem:[%s799 + $0x7c] sm:$0xf]
        %s832 = scalar_lea.vmem [#allocation5], 128
        %v833 = vld [vmem:[%s832] sm:$0xf]
        %v834 = vld [vmem:[%s832 + $0x4] sm:$0xf]
        %v835 = vld [vmem:[%s832 + $0x8] sm:$0xf]
        %v836 = vld [vmem:[%s832 + $0xc] sm:$0xf]
        %v837 = vld [vmem:[%s832 + $0x10] sm:$0xf]
        %v838 = vld [vmem:[%s832 + $0x14] sm:$0xf]
        %v839 = vld [vmem:[%s832 + $0x18] sm:$0xf]
        %v840 = vld [vmem:[%s832 + $0x1c] sm:$0xf]
        %v841 = vld [vmem:[%s832 + $0x20] sm:$0xf]
        %v842 = vld [vmem:[%s832 + $0x24] sm:$0xf]
        %v843 = vld [vmem:[%s832 + $0x28] sm:$0xf]
        %v844 = vld [vmem:[%s832 + $0x2c] sm:$0xf]
        %v845 = vld [vmem:[%s832 + $0x30] sm:$0xf]
        %v846 = vld [vmem:[%s832 + $0x34] sm:$0xf]
        %v847 = vld [vmem:[%s832 + $0x38] sm:$0xf]
        %v848 = vld [vmem:[%s832 + $0x3c] sm:$0xf]
        %v881 = vunpack.c.l.b16 %v800
        %v882 = vunpack.c.l.b16 %v801
        %v883 = vunpack.c.l.b16 %v802
        %v884 = vunpack.c.l.b16 %v803
        %v885 = vunpack.c.l.b16 %v804
        %v886 = vunpack.c.l.b16 %v805
        %v887 = vunpack.c.l.b16 %v806
        %v888 = vunpack.c.l.b16 %v807
        %v889 = vunpack.c.l.b16 %v808
        %v890 = vunpack.c.l.b16 %v809
        %v891 = vunpack.c.l.b16 %v810
        %v892 = vunpack.c.l.b16 %v811
        %v893 = vunpack.c.l.b16 %v812
        %v894 = vunpack.c.l.b16 %v813
        %v895 = vunpack.c.l.b16 %v814
        %v896 = vunpack.c.l.b16 %v815
        %v897 = vunpack.c.l.b16 %v816
        %v898 = vunpack.c.l.b16 %v817
        %v899 = vunpack.c.l.b16 %v818
        %v900 = vunpack.c.l.b16 %v819
        %v901 = vunpack.c.l.b16 %v820
        %v902 = vunpack.c.l.b16 %v821
        %v903 = vunpack.c.l.b16 %v822
        %v904 = vunpack.c.l.b16 %v823
        %v905 = vunpack.c.l.b16 %v824
        %v906 = vunpack.c.l.b16 %v825
        %v907 = vunpack.c.l.b16 %v826
        %v908 = vunpack.c.l.b16 %v827
        %v909 = vunpack.c.l.b16 %v828
        %v910 = vunpack.c.l.b16 %v829
        %v911 = vunpack.c.l.b16 %v830
        %v912 = vunpack.c.l.b16 %v831
        %v913 = vpack.c.b16 %v882, %v881
        %v914 = vpack.c.b16 %v884, %v883
        %v915 = vpack.c.b16 %v886, %v885
        %v916 = vpack.c.b16 %v888, %v887
        %v917 = vpack.c.b16 %v890, %v889
        %v918 = vpack.c.b16 %v892, %v891
        %v919 = vpack.c.b16 %v894, %v893
        %v920 = vpack.c.b16 %v896, %v895
        %v921 = vpack.c.b16 %v898, %v897
        %v922 = vpack.c.b16 %v900, %v899
        %v923 = vpack.c.b16 %v902, %v901
        %v924 = vpack.c.b16 %v904, %v903
        %v925 = vpack.c.b16 %v906, %v905
        %v926 = vpack.c.b16 %v908, %v907
        %v927 = vpack.c.b16 %v910, %v909
        %v928 = vpack.c.b16 %v912, %v911
        %v961 = vunpack.c.l.b16 %v833
        %v962 = vunpack.c.l.b16 %v834
        %v963 = vunpack.c.l.b16 %v835
        %v964 = vunpack.c.l.b16 %v836
        %v965 = vunpack.c.l.b16 %v837
        %v966 = vunpack.c.l.b16 %v838
        %v967 = vunpack.c.l.b16 %v839
        %v968 = vunpack.c.l.b16 %v840
        %v969 = vunpack.c.l.b16 %v841
        %v970 = vunpack.c.l.b16 %v842
        %v971 = vunpack.c.l.b16 %v843
        %v972 = vunpack.c.l.b16 %v844
        %v973 = vunpack.c.l.b16 %v845
        %v974 = vunpack.c.l.b16 %v846
        %v975 = vunpack.c.l.b16 %v847
        %v976 = vunpack.c.l.b16 %v848
        %v977 = vpack.c.b16 %v962, %v961
        %v978 = vpack.c.b16 %v964, %v963
        %v979 = vpack.c.b16 %v966, %v965
        %v980 = vpack.c.b16 %v968, %v967
        %v981 = vpack.c.b16 %v970, %v969
        %v982 = vpack.c.b16 %v972, %v971
        %v983 = vpack.c.b16 %v974, %v973
        %v984 = vpack.c.b16 %v976, %v975
        %993 = vmatpush.bf16.msra.mxu0 %v984
        %994 = vmatpush.bf16.msra.mxu0 %v983
        %995 = vmatpush.bf16.msra.mxu0 %v982
        %996 = vmatpush.bf16.msra.mxu0 %v981
        %997 = vmatpush.bf16.msra.mxu0 %v980
        %998 = vmatpush.bf16.msra.mxu0 %v979
        %999 = vmatpush.bf16.msra.mxu0 %v978
        %1000 = vmatpush.bf16.msra.mxu0 %v977
        %1001 = vmatmul.bf16.gmra.mxu0 %v913
        %v1002 = vpop.f32.mrf.mxu0
        %v1003 = vadd.f32 0.0, %v1002
        %v1004 = vpop.f32.mrf.mxu0
        %v1005 = vadd.f32 0.0, %v1004
        %1006 = vmatmul.bf16.gmra.mxu0 %v914
        %v1007 = vpop.f32.mrf.mxu0
        %v1008 = vadd.f32 0.0, %v1007
        %v1009 = vpop.f32.mrf.mxu0
        %v1010 = vadd.f32 0.0, %v1009
        %1011 = vmatmul.bf16.gmra.mxu0 %v915
        %v1012 = vpop.f32.mrf.mxu0
        %v1013 = vadd.f32 0.0, %v1012
        %v1014 = vpop.f32.mrf.mxu0
        %v1015 = vadd.f32 0.0, %v1014
        %1016 = vmatmul.bf16.gmra.mxu0 %v916
        %v1017 = vpop.f32.mrf.mxu0
        %v1018 = vadd.f32 0.0, %v1017
        %v1019 = vpop.f32.mrf.mxu0
        %v1020 = vadd.f32 0.0, %v1019
        %1021 = vmatmul.bf16.gmra.mxu0 %v917
        %v1022 = vpop.f32.mrf.mxu0
        %v1023 = vadd.f32 0.0, %v1022
        %v1024 = vpop.f32.mrf.mxu0
        %v1025 = vadd.f32 0.0, %v1024
        %1026 = vmatmul.bf16.gmra.mxu0 %v918
        %v1027 = vpop.f32.mrf.mxu0
        %v1028 = vadd.f32 0.0, %v1027
        %v1029 = vpop.f32.mrf.mxu0
        %v1030 = vadd.f32 0.0, %v1029
        %1031 = vmatmul.bf16.gmra.mxu0 %v919
        %v1032 = vpop.f32.mrf.mxu0
        %v1033 = vadd.f32 0.0, %v1032
        %v1034 = vpop.f32.mrf.mxu0
        %v1035 = vadd.f32 0.0, %v1034
        %1036 = vmatmul.bf16.gmra.mxu0 %v920
        %v1037 = vpop.f32.mrf.mxu0
        %v1038 = vadd.f32 0.0, %v1037
        %v1039 = vpop.f32.mrf.mxu0
        %v1040 = vadd.f32 0.0, %v1039
        %1041 = vmatmul.bf16.gmra.mxu0 %v921
        %v1042 = vpop.f32.mrf.mxu0
        %v1043 = vadd.f32 0.0, %v1042
        %v1044 = vpop.f32.mrf.mxu0
        %v1045 = vadd.f32 0.0, %v1044
        %1046 = vmatmul.bf16.gmra.mxu0 %v922
        %v1047 = vpop.f32.mrf.mxu0
        %v1048 = vadd.f32 0.0, %v1047
        %v1049 = vpop.f32.mrf.mxu0
        %v1050 = vadd.f32 0.0, %v1049
        %1051 = vmatmul.bf16.gmra.mxu0 %v923
        %v1052 = vpop.f32.mrf.mxu0
        %v1053 = vadd.f32 0.0, %v1052
        %v1054 = vpop.f32.mrf.mxu0
        %v1055 = vadd.f32 0.0, %v1054
        %1056 = vmatmul.bf16.gmra.mxu0 %v924
        %v1057 = vpop.f32.mrf.mxu0
        %v1058 = vadd.f32 0.0, %v1057
        %v1059 = vpop.f32.mrf.mxu0
        %v1060 = vadd.f32 0.0, %v1059
        %1061 = vmatmul.bf16.gmra.mxu0 %v925
        %v1062 = vpop.f32.mrf.mxu0
        %v1063 = vadd.f32 0.0, %v1062
        %v1064 = vpop.f32.mrf.mxu0
        %v1065 = vadd.f32 0.0, %v1064
        %1066 = vmatmul.bf16.gmra.mxu0 %v926
        %v1067 = vpop.f32.mrf.mxu0
        %v1068 = vadd.f32 0.0, %v1067
        %v1069 = vpop.f32.mrf.mxu0
        %v1070 = vadd.f32 0.0, %v1069
        %1071 = vmatmul.bf16.gmra.mxu0 %v927
        %v1072 = vpop.f32.mrf.mxu0
        %v1073 = vadd.f32 0.0, %v1072
        %v1074 = vpop.f32.mrf.mxu0
        %v1075 = vadd.f32 0.0, %v1074
        %1076 = vmatmul.bf16.gmra.mxu0 %v928
        %v1077 = vpop.f32.mrf.mxu0
        %v1078 = vadd.f32 0.0, %v1077
        %v1079 = vpop.f32.mrf.mxu0
        %v1080 = vadd.f32 0.0, %v1079
        %1081 = vdwg.mxu0
        %v1082 = vadd.f32 %v720, %v1003
        %v1083 = vadd.f32 %v722, %v1005
        %v1084 = vadd.f32 %v725, %v1008
        %v1085 = vadd.f32 %v727, %v1010
        %v1086 = vadd.f32 %v730, %v1013
        %v1087 = vadd.f32 %v732, %v1015
        %v1088 = vadd.f32 %v735, %v1018
        %v1089 = vadd.f32 %v737, %v1020
        %v1090 = vadd.f32 %v740, %v1023
        %v1091 = vadd.f32 %v742, %v1025
        %v1092 = vadd.f32 %v745, %v1028
        %v1093 = vadd.f32 %v747, %v1030
        %v1094 = vadd.f32 %v750, %v1033
        %v1095 = vadd.f32 %v752, %v1035
        %v1096 = vadd.f32 %v755, %v1038
        %v1097 = vadd.f32 %v757, %v1040
        %v1098 = vadd.f32 %v760, %v1043
        %v1099 = vadd.f32 %v762, %v1045
        %v1100 = vadd.f32 %v765, %v1048
        %v1101 = vadd.f32 %v767, %v1050
        %v1102 = vadd.f32 %v770, %v1053
        %v1103 = vadd.f32 %v772, %v1055
        %v1104 = vadd.f32 %v775, %v1058
        %v1105 = vadd.f32 %v777, %v1060
        %v1106 = vadd.f32 %v780, %v1063
        %v1107 = vadd.f32 %v782, %v1065
        %v1108 = vadd.f32 %v785, %v1068
        %v1109 = vadd.f32 %v787, %v1070
        %v1110 = vadd.f32 %v790, %v1073
        %v1111 = vadd.f32 %v792, %v1075
        %v1112 = vadd.f32 %v795, %v1078
        %v1113 = vadd.f32 %v797, %v1080
        %v1114 = vld [vmem:[%s2] sm:$0x1]
        %v1116 = vperm.slane %v1114, 0
        %v1118 = vmul.f32 %v1082, %v1116
        %v1119 = vmul.f32 %v1083, %v1116
        %v1120 = vmul.f32 %v1084, %v1116
        %v1121 = vmul.f32 %v1085, %v1116
        %v1122 = vmul.f32 %v1086, %v1116
        %v1123 = vmul.f32 %v1087, %v1116
        %v1124 = vmul.f32 %v1088, %v1116
        %v1125 = vmul.f32 %v1089, %v1116
        %v1126 = vmul.f32 %v1090, %v1116
        %v1127 = vmul.f32 %v1091, %v1116
        %v1128 = vmul.f32 %v1092, %v1116
        %v1129 = vmul.f32 %v1093, %v1116
        %v1130 = vmul.f32 %v1094, %v1116
        %v1131 = vmul.f32 %v1095, %v1116
        %v1132 = vmul.f32 %v1096, %v1116
        %v1133 = vmul.f32 %v1097, %v1116
        %v1134 = vmul.f32 %v1098, %v1116
        %v1135 = vmul.f32 %v1099, %v1116
        %v1136 = vmul.f32 %v1100, %v1116
        %v1137 = vmul.f32 %v1101, %v1116
        %v1138 = vmul.f32 %v1102, %v1116
        %v1139 = vmul.f32 %v1103, %v1116
        %v1140 = vmul.f32 %v1104, %v1116
        %v1141 = vmul.f32 %v1105, %v1116
        %v1142 = vmul.f32 %v1106, %v1116
        %v1143 = vmul.f32 %v1107, %v1116
        %v1144 = vmul.f32 %v1108, %v1116
        %v1145 = vmul.f32 %v1109, %v1116
        %v1146 = vmul.f32 %v1110, %v1116
        %v1147 = vmul.f32 %v1111, %v1116
        %v1148 = vmul.f32 %v1112, %v1116
        %v1149 = vmul.f32 %v1113, %v1116
        %v1150 = vld [vmem:[%s3] sm:$0x1]
        %v1152 = vperm.slane %v1150, 0
        %v1154 = vadd.f32 %v1118, %v1152
        %v1155 = vadd.f32 %v1119, %v1152
        %v1156 = vadd.f32 %v1120, %v1152
        %v1157 = vadd.f32 %v1121, %v1152
        %v1158 = vadd.f32 %v1122, %v1152
        %v1159 = vadd.f32 %v1123, %v1152
        %v1160 = vadd.f32 %v1124, %v1152
        %v1161 = vadd.f32 %v1125, %v1152
        %v1162 = vadd.f32 %v1126, %v1152
        %v1163 = vadd.f32 %v1127, %v1152
        %v1164 = vadd.f32 %v1128, %v1152
        %v1165 = vadd.f32 %v1129, %v1152
        %v1166 = vadd.f32 %v1130, %v1152
        %v1167 = vadd.f32 %v1131, %v1152
        %v1168 = vadd.f32 %v1132, %v1152
        %v1169 = vadd.f32 %v1133, %v1152
        %v1170 = vadd.f32 %v1134, %v1152
        %v1171 = vadd.f32 %v1135, %v1152
        %v1172 = vadd.f32 %v1136, %v1152
        %v1173 = vadd.f32 %v1137, %v1152
        %v1174 = vadd.f32 %v1138, %v1152
        %v1175 = vadd.f32 %v1139, %v1152
        %v1176 = vadd.f32 %v1140, %v1152
        %v1177 = vadd.f32 %v1141, %v1152
        %v1178 = vadd.f32 %v1142, %v1152
        %v1179 = vadd.f32 %v1143, %v1152
        %v1180 = vadd.f32 %v1144, %v1152
        %v1181 = vadd.f32 %v1145, %v1152
        %v1182 = vadd.f32 %v1146, %v1152
        %v1183 = vadd.f32 %v1147, %v1152
        %v1184 = vadd.f32 %v1148, %v1152
        %v1185 = vadd.f32 %v1149, %v1152
        %v1186 = vxor.u32 %v1154, 2147483648
        %v1187 = vxor.u32 %v1155, 2147483648
        %v1188 = vxor.u32 %v1156, 2147483648
        %v1189 = vxor.u32 %v1157, 2147483648
        %v1190 = vxor.u32 %v1158, 2147483648
        %v1191 = vxor.u32 %v1159, 2147483648
        %v1192 = vxor.u32 %v1160, 2147483648
        %v1193 = vxor.u32 %v1161, 2147483648
        %v1194 = vxor.u32 %v1162, 2147483648
        %v1195 = vxor.u32 %v1163, 2147483648
        %v1196 = vxor.u32 %v1164, 2147483648
        %v1197 = vxor.u32 %v1165, 2147483648
        %v1198 = vxor.u32 %v1166, 2147483648
        %v1199 = vxor.u32 %v1167, 2147483648
        %v1200 = vxor.u32 %v1168, 2147483648
        %v1201 = vxor.u32 %v1169, 2147483648
        %v1202 = vxor.u32 %v1170, 2147483648
        %v1203 = vxor.u32 %v1171, 2147483648
        %v1204 = vxor.u32 %v1172, 2147483648
        %v1205 = vxor.u32 %v1173, 2147483648
        %v1206 = vxor.u32 %v1174, 2147483648
        %v1207 = vxor.u32 %v1175, 2147483648
        %v1208 = vxor.u32 %v1176, 2147483648
        %v1209 = vxor.u32 %v1177, 2147483648
        %v1210 = vxor.u32 %v1178, 2147483648
        %v1211 = vxor.u32 %v1179, 2147483648
        %v1212 = vxor.u32 %v1180, 2147483648
        %v1213 = vxor.u32 %v1181, 2147483648
        %v1214 = vxor.u32 %v1182, 2147483648
        %v1215 = vxor.u32 %v1183, 2147483648
        %v1216 = vxor.u32 %v1184, 2147483648
        %v1217 = vxor.u32 %v1185, 2147483648
        %v1218 = vmul.f32 %v1186, 1.442695
        %v1219 = vpow.pop %v1218
        %v1220 = vmul.f32 %v1187, 1.442695
        %v1221 = vpow.pop %v1220
        %v1222 = vmul.f32 %v1188, 1.442695
        %v1223 = vpow.pop %v1222
        %v1224 = vmul.f32 %v1189, 1.442695
        %v1225 = vpow.pop %v1224
        %v1226 = vmul.f32 %v1190, 1.442695
        %v1227 = vpow.pop %v1226
        %v1228 = vmul.f32 %v1191, 1.442695
        %v1229 = vpow.pop %v1228
        %v1230 = vmul.f32 %v1192, 1.442695
        %v1231 = vpow.pop %v1230
        %v1232 = vmul.f32 %v1193, 1.442695
        %v1233 = vpow.pop %v1232
        %v1234 = vmul.f32 %v1194, 1.442695
        %v1235 = vpow.pop %v1234
        %v1236 = vmul.f32 %v1195, 1.442695
        %v1237 = vpow.pop %v1236
        %v1238 = vmul.f32 %v1196, 1.442695
        %v1239 = vpow.pop %v1238
        %v1240 = vmul.f32 %v1197, 1.442695
        %v1241 = vpow.pop %v1240
        %v1242 = vmul.f32 %v1198, 1.442695
        %v1243 = vpow.pop %v1242
        %v1244 = vmul.f32 %v1199, 1.442695
        %v1245 = vpow.pop %v1244
        %v1246 = vmul.f32 %v1200, 1.442695
        %v1247 = vpow.pop %v1246
        %v1248 = vmul.f32 %v1201, 1.442695
        %v1249 = vpow.pop %v1248
        %v1250 = vmul.f32 %v1202, 1.442695
        %v1251 = vpow.pop %v1250
        %v1252 = vmul.f32 %v1203, 1.442695
        %v1253 = vpow.pop %v1252
        %v1254 = vmul.f32 %v1204, 1.442695
        %v1255 = vpow.pop %v1254
        %v1256 = vmul.f32 %v1205, 1.442695
        %v1257 = vpow.pop %v1256
        %v1258 = vmul.f32 %v1206, 1.442695
        %v1259 = vpow.pop %v1258
        %v1260 = vmul.f32 %v1207, 1.442695
        %v1261 = vpow.pop %v1260
        %v1262 = vmul.f32 %v1208, 1.442695
        %v1263 = vpow.pop %v1262
        %v1264 = vmul.f32 %v1209, 1.442695
        %v1265 = vpow.pop %v1264
        %v1266 = vmul.f32 %v1210, 1.442695
        %v1267 = vpow.pop %v1266
        %v1268 = vmul.f32 %v1211, 1.442695
        %v1269 = vpow.pop %v1268
        %v1270 = vmul.f32 %v1212, 1.442695
        %v1271 = vpow.pop %v1270
        %v1272 = vmul.f32 %v1213, 1.442695
        %v1273 = vpow.pop %v1272
        %v1274 = vmul.f32 %v1214, 1.442695
        %v1275 = vpow.pop %v1274
        %v1276 = vmul.f32 %v1215, 1.442695
        %v1277 = vpow.pop %v1276
        %v1278 = vmul.f32 %v1216, 1.442695
        %v1279 = vpow.pop %v1278
        %v1280 = vmul.f32 %v1217, 1.442695
        %v1281 = vpow.pop %v1280
        %v1282 = vadd.f32 %v1219, 1.0
        %v1283 = vadd.f32 %v1221, 1.0
        %v1284 = vadd.f32 %v1223, 1.0
        %v1285 = vadd.f32 %v1225, 1.0
        %v1286 = vadd.f32 %v1227, 1.0
        %v1287 = vadd.f32 %v1229, 1.0
        %v1288 = vadd.f32 %v1231, 1.0
        %v1289 = vadd.f32 %v1233, 1.0
        %v1290 = vadd.f32 %v1235, 1.0
        %v1291 = vadd.f32 %v1237, 1.0
        %v1292 = vadd.f32 %v1239, 1.0
        %v1293 = vadd.f32 %v1241, 1.0
        %v1294 = vadd.f32 %v1243, 1.0
        %v1295 = vadd.f32 %v1245, 1.0
        %v1296 = vadd.f32 %v1247, 1.0
        %v1297 = vadd.f32 %v1249, 1.0
        %v1298 = vadd.f32 %v1251, 1.0
        %v1299 = vadd.f32 %v1253, 1.0
        %v1300 = vadd.f32 %v1255, 1.0
        %v1301 = vadd.f32 %v1257, 1.0
        %v1302 = vadd.f32 %v1259, 1.0
        %v1303 = vadd.f32 %v1261, 1.0
        %v1304 = vadd.f32 %v1263, 1.0
        %v1305 = vadd.f32 %v1265, 1.0
        %v1306 = vadd.f32 %v1267, 1.0
        %v1307 = vadd.f32 %v1269, 1.0
        %v1308 = vadd.f32 %v1271, 1.0
        %v1309 = vadd.f32 %v1273, 1.0
        %v1310 = vadd.f32 %v1275, 1.0
        %v1311 = vadd.f32 %v1277, 1.0
        %v1312 = vadd.f32 %v1279, 1.0
        %v1313 = vadd.f32 %v1281, 1.0
        %v1314 = vrcp.pop %v1282
        %v1315 = vmul.f32 %v1282, %v1314
        %v1316 = vsub.f32 1.0, %v1315
        %v1317 = vmul.f32 %v1314, %v1316
        %v1318 = vadd.f32 %v1314, %v1317
        %vm1319 = vweird.f32 %v1282
        %vm1320 = vweird.f32 %v1314
        %vm1321 = vmor %vm1319, %vm1320
        %v1322 = vsel %vm1321, %v1314, %v1318
        %v1323 = vand.u32 2147483647, %v1282
        %vm1324 = vcmp.eq.f32.partialorder %v1323, 8.507059e+37
        %v1325 = vand.u32 %v1282, 2147483648
        %v1326 = vor.u32 1.1754944e-38, %v1325
        %v1327 = vsel %vm1324, %v1326, %v1322
        %v1328 = vmul.f32 1.0, %v1327
        %v1329 = vrcp.pop %v1283
        %v1330 = vmul.f32 %v1283, %v1329
        %v1331 = vsub.f32 1.0, %v1330
        %v1332 = vmul.f32 %v1329, %v1331
        %v1333 = vadd.f32 %v1329, %v1332
        %vm1334 = vweird.f32 %v1283
        %vm1335 = vweird.f32 %v1329
        %vm1336 = vmor %vm1334, %vm1335
        %v1337 = vsel %vm1336, %v1329, %v1333
        %v1338 = vand.u32 2147483647, %v1283
        %vm1339 = vcmp.eq.f32.partialorder %v1338, 8.507059e+37
        %v1340 = vand.u32 %v1283, 2147483648
        %v1341 = vor.u32 1.1754944e-38, %v1340
        %v1342 = vsel %vm1339, %v1341, %v1337
        %v1343 = vmul.f32 1.0, %v1342
        %v1344 = vrcp.pop %v1284
        %v1345 = vmul.f32 %v1284, %v1344
        %v1346 = vsub.f32 1.0, %v1345
        %v1347 = vmul.f32 %v1344, %v1346
        %v1348 = vadd.f32 %v1344, %v1347
        %vm1349 = vweird.f32 %v1284
        %vm1350 = vweird.f32 %v1344
        %vm1351 = vmor %vm1349, %vm1350
        %v1352 = vsel %vm1351, %v1344, %v1348
        %v1353 = vand.u32 2147483647, %v1284
        %vm1354 = vcmp.eq.f32.partialorder %v1353, 8.507059e+37
        %v1355 = vand.u32 %v1284, 2147483648
        %v1356 = vor.u32 1.1754944e-38, %v1355
        %v1357 = vsel %vm1354, %v1356, %v1352
        %v1358 = vmul.f32 1.0, %v1357
        %v1359 = vrcp.pop %v1285
        %v1360 = vmul.f32 %v1285, %v1359
        %v1361 = vsub.f32 1.0, %v1360
        %v1362 = vmul.f32 %v1359, %v1361
        %v1363 = vadd.f32 %v1359, %v1362
        %vm1364 = vweird.f32 %v1285
        %vm1365 = vweird.f32 %v1359
        %vm1366 = vmor %vm1364, %vm1365
        %v1367 = vsel %vm1366, %v1359, %v1363
        %v1368 = vand.u32 2147483647, %v1285
        %vm1369 = vcmp.eq.f32.partialorder %v1368, 8.507059e+37
        %v1370 = vand.u32 %v1285, 2147483648
        %v1371 = vor.u32 1.1754944e-38, %v1370
        %v1372 = vsel %vm1369, %v1371, %v1367
        %v1373 = vmul.f32 1.0, %v1372
        %v1374 = vrcp.pop %v1286
        %v1375 = vmul.f32 %v1286, %v1374
        %v1376 = vsub.f32 1.0, %v1375
        %v1377 = vmul.f32 %v1374, %v1376
        %v1378 = vadd.f32 %v1374, %v1377
        %vm1379 = vweird.f32 %v1286
        %vm1380 = vweird.f32 %v1374
        %vm1381 = vmor %vm1379, %vm1380
        %v1382 = vsel %vm1381, %v1374, %v1378
        %v1383 = vand.u32 2147483647, %v1286
        %vm1384 = vcmp.eq.f32.partialorder %v1383, 8.507059e+37
        %v1385 = vand.u32 %v1286, 2147483648
        %v1386 = vor.u32 1.1754944e-38, %v1385
        %v1387 = vsel %vm1384, %v1386, %v1382
        %v1388 = vmul.f32 1.0, %v1387
        %v1389 = vrcp.pop %v1287
        %v1390 = vmul.f32 %v1287, %v1389
        %v1391 = vsub.f32 1.0, %v1390
        %v1392 = vmul.f32 %v1389, %v1391
        %v1393 = vadd.f32 %v1389, %v1392
        %vm1394 = vweird.f32 %v1287
        %vm1395 = vweird.f32 %v1389
        %vm1396 = vmor %vm1394, %vm1395
        %v1397 = vsel %vm1396, %v1389, %v1393
        %v1398 = vand.u32 2147483647, %v1287
        %vm1399 = vcmp.eq.f32.partialorder %v1398, 8.507059e+37
        %v1400 = vand.u32 %v1287, 2147483648
        %v1401 = vor.u32 1.1754944e-38, %v1400
        %v1402 = vsel %vm1399, %v1401, %v1397
        %v1403 = vmul.f32 1.0, %v1402
        %v1404 = vrcp.pop %v1288
        %v1405 = vmul.f32 %v1288, %v1404
        %v1406 = vsub.f32 1.0, %v1405
        %v1407 = vmul.f32 %v1404, %v1406
        %v1408 = vadd.f32 %v1404, %v1407
        %vm1409 = vweird.f32 %v1288
        %vm1410 = vweird.f32 %v1404
        %vm1411 = vmor %vm1409, %vm1410
        %v1412 = vsel %vm1411, %v1404, %v1408
        %v1413 = vand.u32 2147483647, %v1288
        %vm1414 = vcmp.eq.f32.partialorder %v1413, 8.507059e+37
        %v1415 = vand.u32 %v1288, 2147483648
        %v1416 = vor.u32 1.1754944e-38, %v1415
        %v1417 = vsel %vm1414, %v1416, %v1412
        %v1418 = vmul.f32 1.0, %v1417
        %v1419 = vrcp.pop %v1289
        %v1420 = vmul.f32 %v1289, %v1419
        %v1421 = vsub.f32 1.0, %v1420
        %v1422 = vmul.f32 %v1419, %v1421
        %v1423 = vadd.f32 %v1419, %v1422
        %vm1424 = vweird.f32 %v1289
        %vm1425 = vweird.f32 %v1419
        %vm1426 = vmor %vm1424, %vm1425
        %v1427 = vsel %vm1426, %v1419, %v1423
        %v1428 = vand.u32 2147483647, %v1289
        %vm1429 = vcmp.eq.f32.partialorder %v1428, 8.507059e+37
        %v1430 = vand.u32 %v1289, 2147483648
        %v1431 = vor.u32 1.1754944e-38, %v1430
        %v1432 = vsel %vm1429, %v1431, %v1427
        %v1433 = vmul.f32 1.0, %v1432
        %v1434 = vrcp.pop %v1290
        %v1435 = vmul.f32 %v1290, %v1434
        %v1436 = vsub.f32 1.0, %v1435
        %v1437 = vmul.f32 %v1434, %v1436
        %v1438 = vadd.f32 %v1434, %v1437
        %vm1439 = vweird.f32 %v1290
        %vm1440 = vweird.f32 %v1434
        %vm1441 = vmor %vm1439, %vm1440
        %v1442 = vsel %vm1441, %v1434, %v1438
        %v1443 = vand.u32 2147483647, %v1290
        %vm1444 = vcmp.eq.f32.partialorder %v1443, 8.507059e+37
        %v1445 = vand.u32 %v1290, 2147483648
        %v1446 = vor.u32 1.1754944e-38, %v1445
        %v1447 = vsel %vm1444, %v1446, %v1442
        %v1448 = vmul.f32 1.0, %v1447
        %v1449 = vrcp.pop %v1291
        %v1450 = vmul.f32 %v1291, %v1449
        %v1451 = vsub.f32 1.0, %v1450
        %v1452 = vmul.f32 %v1449, %v1451
        %v1453 = vadd.f32 %v1449, %v1452
        %vm1454 = vweird.f32 %v1291
        %vm1455 = vweird.f32 %v1449
        %vm1456 = vmor %vm1454, %vm1455
        %v1457 = vsel %vm1456, %v1449, %v1453
        %v1458 = vand.u32 2147483647, %v1291
        %vm1459 = vcmp.eq.f32.partialorder %v1458, 8.507059e+37
        %v1460 = vand.u32 %v1291, 2147483648
        %v1461 = vor.u32 1.1754944e-38, %v1460
        %v1462 = vsel %vm1459, %v1461, %v1457
        %v1463 = vmul.f32 1.0, %v1462
        %v1464 = vrcp.pop %v1292
        %v1465 = vmul.f32 %v1292, %v1464
        %v1466 = vsub.f32 1.0, %v1465
        %v1467 = vmul.f32 %v1464, %v1466
        %v1468 = vadd.f32 %v1464, %v1467
        %vm1469 = vweird.f32 %v1292
        %vm1470 = vweird.f32 %v1464
        %vm1471 = vmor %vm1469, %vm1470
        %v1472 = vsel %vm1471, %v1464, %v1468
        %v1473 = vand.u32 2147483647, %v1292
        %vm1474 = vcmp.eq.f32.partialorder %v1473, 8.507059e+37
        %v1475 = vand.u32 %v1292, 2147483648
        %v1476 = vor.u32 1.1754944e-38, %v1475
        %v1477 = vsel %vm1474, %v1476, %v1472
        %v1478 = vmul.f32 1.0, %v1477
        %v1479 = vrcp.pop %v1293
        %v1480 = vmul.f32 %v1293, %v1479
        %v1481 = vsub.f32 1.0, %v1480
        %v1482 = vmul.f32 %v1479, %v1481
        %v1483 = vadd.f32 %v1479, %v1482
        %vm1484 = vweird.f32 %v1293
        %vm1485 = vweird.f32 %v1479
        %vm1486 = vmor %vm1484, %vm1485
        %v1487 = vsel %vm1486, %v1479, %v1483
        %v1488 = vand.u32 2147483647, %v1293
        %vm1489 = vcmp.eq.f32.partialorder %v1488, 8.507059e+37
        %v1490 = vand.u32 %v1293, 2147483648
        %v1491 = vor.u32 1.1754944e-38, %v1490
        %v1492 = vsel %vm1489, %v1491, %v1487
        %v1493 = vmul.f32 1.0, %v1492
        %v1494 = vrcp.pop %v1294
        %v1495 = vmul.f32 %v1294, %v1494
        %v1496 = vsub.f32 1.0, %v1495
        %v1497 = vmul.f32 %v1494, %v1496
        %v1498 = vadd.f32 %v1494, %v1497
        %vm1499 = vweird.f32 %v1294
        %vm1500 = vweird.f32 %v1494
        %vm1501 = vmor %vm1499, %vm1500
        %v1502 = vsel %vm1501, %v1494, %v1498
        %v1503 = vand.u32 2147483647, %v1294
        %vm1504 = vcmp.eq.f32.partialorder %v1503, 8.507059e+37
        %v1505 = vand.u32 %v1294, 2147483648
        %v1506 = vor.u32 1.1754944e-38, %v1505
        %v1507 = vsel %vm1504, %v1506, %v1502
        %v1508 = vmul.f32 1.0, %v1507
        %v1509 = vrcp.pop %v1295
        %v1510 = vmul.f32 %v1295, %v1509
        %v1511 = vsub.f32 1.0, %v1510
        %v1512 = vmul.f32 %v1509, %v1511
        %v1513 = vadd.f32 %v1509, %v1512
        %vm1514 = vweird.f32 %v1295
        %vm1515 = vweird.f32 %v1509
        %vm1516 = vmor %vm1514, %vm1515
        %v1517 = vsel %vm1516, %v1509, %v1513
        %v1518 = vand.u32 2147483647, %v1295
        %vm1519 = vcmp.eq.f32.partialorder %v1518, 8.507059e+37
        %v1520 = vand.u32 %v1295, 2147483648
        %v1521 = vor.u32 1.1754944e-38, %v1520
        %v1522 = vsel %vm1519, %v1521, %v1517
        %v1523 = vmul.f32 1.0, %v1522
        %v1524 = vrcp.pop %v1296
        %v1525 = vmul.f32 %v1296, %v1524
        %v1526 = vsub.f32 1.0, %v1525
        %v1527 = vmul.f32 %v1524, %v1526
        %v1528 = vadd.f32 %v1524, %v1527
        %vm1529 = vweird.f32 %v1296
        %vm1530 = vweird.f32 %v1524
        %vm1531 = vmor %vm1529, %vm1530
        %v1532 = vsel %vm1531, %v1524, %v1528
        %v1533 = vand.u32 2147483647, %v1296
        %vm1534 = vcmp.eq.f32.partialorder %v1533, 8.507059e+37
        %v1535 = vand.u32 %v1296, 2147483648
        %v1536 = vor.u32 1.1754944e-38, %v1535
        %v1537 = vsel %vm1534, %v1536, %v1532
        %v1538 = vmul.f32 1.0, %v1537
        %v1539 = vrcp.pop %v1297
        %v1540 = vmul.f32 %v1297, %v1539
        %v1541 = vsub.f32 1.0, %v1540
        %v1542 = vmul.f32 %v1539, %v1541
        %v1543 = vadd.f32 %v1539, %v1542
        %vm1544 = vweird.f32 %v1297
        %vm1545 = vweird.f32 %v1539
        %vm1546 = vmor %vm1544, %vm1545
        %v1547 = vsel %vm1546, %v1539, %v1543
        %v1548 = vand.u32 2147483647, %v1297
        %vm1549 = vcmp.eq.f32.partialorder %v1548, 8.507059e+37
        %v1550 = vand.u32 %v1297, 2147483648
        %v1551 = vor.u32 1.1754944e-38, %v1550
        %v1552 = vsel %vm1549, %v1551, %v1547
        %v1553 = vmul.f32 1.0, %v1552
        %v1554 = vrcp.pop %v1298
        %v1555 = vmul.f32 %v1298, %v1554
        %v1556 = vsub.f32 1.0, %v1555
        %v1557 = vmul.f32 %v1554, %v1556
        %v1558 = vadd.f32 %v1554, %v1557
        %vm1559 = vweird.f32 %v1298
        %vm1560 = vweird.f32 %v1554
        %vm1561 = vmor %vm1559, %vm1560
        %v1562 = vsel %vm1561, %v1554, %v1558
        %v1563 = vand.u32 2147483647, %v1298
        %vm1564 = vcmp.eq.f32.partialorder %v1563, 8.507059e+37
        %v1565 = vand.u32 %v1298, 2147483648
        %v1566 = vor.u32 1.1754944e-38, %v1565
        %v1567 = vsel %vm1564, %v1566, %v1562
        %v1568 = vmul.f32 1.0, %v1567
        %v1569 = vrcp.pop %v1299
        %v1570 = vmul.f32 %v1299, %v1569
        %v1571 = vsub.f32 1.0, %v1570
        %v1572 = vmul.f32 %v1569, %v1571
        %v1573 = vadd.f32 %v1569, %v1572
        %vm1574 = vweird.f32 %v1299
        %vm1575 = vweird.f32 %v1569
        %vm1576 = vmor %vm1574, %vm1575
        %v1577 = vsel %vm1576, %v1569, %v1573
        %v1578 = vand.u32 2147483647, %v1299
        %vm1579 = vcmp.eq.f32.partialorder %v1578, 8.507059e+37
        %v1580 = vand.u32 %v1299, 2147483648
        %v1581 = vor.u32 1.1754944e-38, %v1580
        %v1582 = vsel %vm1579, %v1581, %v1577
        %v1583 = vmul.f32 1.0, %v1582
        %v1584 = vrcp.pop %v1300
        %v1585 = vmul.f32 %v1300, %v1584
        %v1586 = vsub.f32 1.0, %v1585
        %v1587 = vmul.f32 %v1584, %v1586
        %v1588 = vadd.f32 %v1584, %v1587
        %vm1589 = vweird.f32 %v1300
        %vm1590 = vweird.f32 %v1584
        %vm1591 = vmor %vm1589, %vm1590
        %v1592 = vsel %vm1591, %v1584, %v1588
        %v1593 = vand.u32 2147483647, %v1300
        %vm1594 = vcmp.eq.f32.partialorder %v1593, 8.507059e+37
        %v1595 = vand.u32 %v1300, 2147483648
        %v1596 = vor.u32 1.1754944e-38, %v1595
        %v1597 = vsel %vm1594, %v1596, %v1592
        %v1598 = vmul.f32 1.0, %v1597
        %v1599 = vrcp.pop %v1301
        %v1600 = vmul.f32 %v1301, %v1599
        %v1601 = vsub.f32 1.0, %v1600
        %v1602 = vmul.f32 %v1599, %v1601
        %v1603 = vadd.f32 %v1599, %v1602
        %vm1604 = vweird.f32 %v1301
        %vm1605 = vweird.f32 %v1599
        %vm1606 = vmor %vm1604, %vm1605
        %v1607 = vsel %vm1606, %v1599, %v1603
        %v1608 = vand.u32 2147483647, %v1301
        %vm1609 = vcmp.eq.f32.partialorder %v1608, 8.507059e+37
        %v1610 = vand.u32 %v1301, 2147483648
        %v1611 = vor.u32 1.1754944e-38, %v1610
        %v1612 = vsel %vm1609, %v1611, %v1607
        %v1613 = vmul.f32 1.0, %v1612
        %v1614 = vrcp.pop %v1302
        %v1615 = vmul.f32 %v1302, %v1614
        %v1616 = vsub.f32 1.0, %v1615
        %v1617 = vmul.f32 %v1614, %v1616
        %v1618 = vadd.f32 %v1614, %v1617
        %vm1619 = vweird.f32 %v1302
        %vm1620 = vweird.f32 %v1614
        %vm1621 = vmor %vm1619, %vm1620
        %v1622 = vsel %vm1621, %v1614, %v1618
        %v1623 = vand.u32 2147483647, %v1302
        %vm1624 = vcmp.eq.f32.partialorder %v1623, 8.507059e+37
        %v1625 = vand.u32 %v1302, 2147483648
        %v1626 = vor.u32 1.1754944e-38, %v1625
        %v1627 = vsel %vm1624, %v1626, %v1622
        %v1628 = vmul.f32 1.0, %v1627
        %v1629 = vrcp.pop %v1303
        %v1630 = vmul.f32 %v1303, %v1629
        %v1631 = vsub.f32 1.0, %v1630
        %v1632 = vmul.f32 %v1629, %v1631
        %v1633 = vadd.f32 %v1629, %v1632
        %vm1634 = vweird.f32 %v1303
        %vm1635 = vweird.f32 %v1629
        %vm1636 = vmor %vm1634, %vm1635
        %v1637 = vsel %vm1636, %v1629, %v1633
        %v1638 = vand.u32 2147483647, %v1303
        %vm1639 = vcmp.eq.f32.partialorder %v1638, 8.507059e+37
        %v1640 = vand.u32 %v1303, 2147483648
        %v1641 = vor.u32 1.1754944e-38, %v1640
        %v1642 = vsel %vm1639, %v1641, %v1637
        %v1643 = vmul.f32 1.0, %v1642
        %v1644 = vrcp.pop %v1304
        %v1645 = vmul.f32 %v1304, %v1644
        %v1646 = vsub.f32 1.0, %v1645
        %v1647 = vmul.f32 %v1644, %v1646
        %v1648 = vadd.f32 %v1644, %v1647
        %vm1649 = vweird.f32 %v1304
        %vm1650 = vweird.f32 %v1644
        %vm1651 = vmor %vm1649, %vm1650
        %v1652 = vsel %vm1651, %v1644, %v1648
        %v1653 = vand.u32 2147483647, %v1304
        %vm1654 = vcmp.eq.f32.partialorder %v1653, 8.507059e+37
        %v1655 = vand.u32 %v1304, 2147483648
        %v1656 = vor.u32 1.1754944e-38, %v1655
        %v1657 = vsel %vm1654, %v1656, %v1652
        %v1658 = vmul.f32 1.0, %v1657
        %v1659 = vrcp.pop %v1305
        %v1660 = vmul.f32 %v1305, %v1659
        %v1661 = vsub.f32 1.0, %v1660
        %v1662 = vmul.f32 %v1659, %v1661
        %v1663 = vadd.f32 %v1659, %v1662
        %vm1664 = vweird.f32 %v1305
        %vm1665 = vweird.f32 %v1659
        %vm1666 = vmor %vm1664, %vm1665
        %v1667 = vsel %vm1666, %v1659, %v1663
        %v1668 = vand.u32 2147483647, %v1305
        %vm1669 = vcmp.eq.f32.partialorder %v1668, 8.507059e+37
        %v1670 = vand.u32 %v1305, 2147483648
        %v1671 = vor.u32 1.1754944e-38, %v1670
        %v1672 = vsel %vm1669, %v1671, %v1667
        %v1673 = vmul.f32 1.0, %v1672
        %v1674 = vrcp.pop %v1306
        %v1675 = vmul.f32 %v1306, %v1674
        %v1676 = vsub.f32 1.0, %v1675
        %v1677 = vmul.f32 %v1674, %v1676
        %v1678 = vadd.f32 %v1674, %v1677
        %vm1679 = vweird.f32 %v1306
        %vm1680 = vweird.f32 %v1674
        %vm1681 = vmor %vm1679, %vm1680
        %v1682 = vsel %vm1681, %v1674, %v1678
        %v1683 = vand.u32 2147483647, %v1306
        %vm1684 = vcmp.eq.f32.partialorder %v1683, 8.507059e+37
        %v1685 = vand.u32 %v1306, 2147483648
        %v1686 = vor.u32 1.1754944e-38, %v1685
        %v1687 = vsel %vm1684, %v1686, %v1682
        %v1688 = vmul.f32 1.0, %v1687
        %v1689 = vrcp.pop %v1307
        %v1690 = vmul.f32 %v1307, %v1689
        %v1691 = vsub.f32 1.0, %v1690
        %v1692 = vmul.f32 %v1689, %v1691
        %v1693 = vadd.f32 %v1689, %v1692
        %vm1694 = vweird.f32 %v1307
        %vm1695 = vweird.f32 %v1689
        %vm1696 = vmor %vm1694, %vm1695
        %v1697 = vsel %vm1696, %v1689, %v1693
        %v1698 = vand.u32 2147483647, %v1307
        %vm1699 = vcmp.eq.f32.partialorder %v1698, 8.507059e+37
        %v1700 = vand.u32 %v1307, 2147483648
        %v1701 = vor.u32 1.1754944e-38, %v1700
        %v1702 = vsel %vm1699, %v1701, %v1697
        %v1703 = vmul.f32 1.0, %v1702
        %v1704 = vrcp.pop %v1308
        %v1705 = vmul.f32 %v1308, %v1704
        %v1706 = vsub.f32 1.0, %v1705
        %v1707 = vmul.f32 %v1704, %v1706
        %v1708 = vadd.f32 %v1704, %v1707
        %vm1709 = vweird.f32 %v1308
        %vm1710 = vweird.f32 %v1704
        %vm1711 = vmor %vm1709, %vm1710
        %v1712 = vsel %vm1711, %v1704, %v1708
        %v1713 = vand.u32 2147483647, %v1308
        %vm1714 = vcmp.eq.f32.partialorder %v1713, 8.507059e+37
        %v1715 = vand.u32 %v1308, 2147483648
        %v1716 = vor.u32 1.1754944e-38, %v1715
        %v1717 = vsel %vm1714, %v1716, %v1712
        %v1718 = vmul.f32 1.0, %v1717
        %v1719 = vrcp.pop %v1309
        %v1720 = vmul.f32 %v1309, %v1719
        %v1721 = vsub.f32 1.0, %v1720
        %v1722 = vmul.f32 %v1719, %v1721
        %v1723 = vadd.f32 %v1719, %v1722
        %vm1724 = vweird.f32 %v1309
        %vm1725 = vweird.f32 %v1719
        %vm1726 = vmor %vm1724, %vm1725
        %v1727 = vsel %vm1726, %v1719, %v1723
        %v1728 = vand.u32 2147483647, %v1309
        %vm1729 = vcmp.eq.f32.partialorder %v1728, 8.507059e+37
        %v1730 = vand.u32 %v1309, 2147483648
        %v1731 = vor.u32 1.1754944e-38, %v1730
        %v1732 = vsel %vm1729, %v1731, %v1727
        %v1733 = vmul.f32 1.0, %v1732
        %v1734 = vrcp.pop %v1310
        %v1735 = vmul.f32 %v1310, %v1734
        %v1736 = vsub.f32 1.0, %v1735
        %v1737 = vmul.f32 %v1734, %v1736
        %v1738 = vadd.f32 %v1734, %v1737
        %vm1739 = vweird.f32 %v1310
        %vm1740 = vweird.f32 %v1734
        %vm1741 = vmor %vm1739, %vm1740
        %v1742 = vsel %vm1741, %v1734, %v1738
        %v1743 = vand.u32 2147483647, %v1310
        %vm1744 = vcmp.eq.f32.partialorder %v1743, 8.507059e+37
        %v1745 = vand.u32 %v1310, 2147483648
        %v1746 = vor.u32 1.1754944e-38, %v1745
        %v1747 = vsel %vm1744, %v1746, %v1742
        %v1748 = vmul.f32 1.0, %v1747
        %v1749 = vrcp.pop %v1311
        %v1750 = vmul.f32 %v1311, %v1749
        %v1751 = vsub.f32 1.0, %v1750
        %v1752 = vmul.f32 %v1749, %v1751
        %v1753 = vadd.f32 %v1749, %v1752
        %vm1754 = vweird.f32 %v1311
        %vm1755 = vweird.f32 %v1749
        %vm1756 = vmor %vm1754, %vm1755
        %v1757 = vsel %vm1756, %v1749, %v1753
        %v1758 = vand.u32 2147483647, %v1311
        %vm1759 = vcmp.eq.f32.partialorder %v1758, 8.507059e+37
        %v1760 = vand.u32 %v1311, 2147483648
        %v1761 = vor.u32 1.1754944e-38, %v1760
        %v1762 = vsel %vm1759, %v1761, %v1757
        %v1763 = vmul.f32 1.0, %v1762
        %v1764 = vrcp.pop %v1312
        %v1765 = vmul.f32 %v1312, %v1764
        %v1766 = vsub.f32 1.0, %v1765
        %v1767 = vmul.f32 %v1764, %v1766
        %v1768 = vadd.f32 %v1764, %v1767
        %vm1769 = vweird.f32 %v1312
        %vm1770 = vweird.f32 %v1764
        %vm1771 = vmor %vm1769, %vm1770
        %v1772 = vsel %vm1771, %v1764, %v1768
        %v1773 = vand.u32 2147483647, %v1312
        %vm1774 = vcmp.eq.f32.partialorder %v1773, 8.507059e+37
        %v1775 = vand.u32 %v1312, 2147483648
        %v1776 = vor.u32 1.1754944e-38, %v1775
        %v1777 = vsel %vm1774, %v1776, %v1772
        %v1778 = vmul.f32 1.0, %v1777
        %v1779 = vrcp.pop %v1313
        %v1780 = vmul.f32 %v1313, %v1779
        %v1781 = vsub.f32 1.0, %v1780
        %v1782 = vmul.f32 %v1779, %v1781
        %v1783 = vadd.f32 %v1779, %v1782
        %vm1784 = vweird.f32 %v1313
        %vm1785 = vweird.f32 %v1779
        %vm1786 = vmor %vm1784, %vm1785
        %v1787 = vsel %vm1786, %v1779, %v1783
        %v1788 = vand.u32 2147483647, %v1313
        %vm1789 = vcmp.eq.f32.partialorder %v1788, 8.507059e+37
        %v1790 = vand.u32 %v1313, 2147483648
        %v1791 = vor.u32 1.1754944e-38, %v1790
        %v1792 = vsel %vm1789, %v1791, %v1787
        %v1793 = vmul.f32 1.0, %v1792
        %v1794 = vmul.f32 %v1154, %v1328
        %v1795 = vmul.f32 %v1155, %v1343
        %v1796 = vmul.f32 %v1156, %v1358
        %v1797 = vmul.f32 %v1157, %v1373
        %v1798 = vmul.f32 %v1158, %v1388
        %v1799 = vmul.f32 %v1159, %v1403
        %v1800 = vmul.f32 %v1160, %v1418
        %v1801 = vmul.f32 %v1161, %v1433
        %v1802 = vmul.f32 %v1162, %v1448
        %v1803 = vmul.f32 %v1163, %v1463
        %v1804 = vmul.f32 %v1164, %v1478
        %v1805 = vmul.f32 %v1165, %v1493
        %v1806 = vmul.f32 %v1166, %v1508
        %v1807 = vmul.f32 %v1167, %v1523
        %v1808 = vmul.f32 %v1168, %v1538
        %v1809 = vmul.f32 %v1169, %v1553
        %v1810 = vmul.f32 %v1170, %v1568
        %v1811 = vmul.f32 %v1171, %v1583
        %v1812 = vmul.f32 %v1172, %v1598
        %v1813 = vmul.f32 %v1173, %v1613
        %v1814 = vmul.f32 %v1174, %v1628
        %v1815 = vmul.f32 %v1175, %v1643
        %v1816 = vmul.f32 %v1176, %v1658
        %v1817 = vmul.f32 %v1177, %v1673
        %v1818 = vmul.f32 %v1178, %v1688
        %v1819 = vmul.f32 %v1179, %v1703
        %v1820 = vmul.f32 %v1180, %v1718
        %v1821 = vmul.f32 %v1181, %v1733
        %v1822 = vmul.f32 %v1182, %v1748
        %v1823 = vmul.f32 %v1183, %v1763
        %v1824 = vmul.f32 %v1184, %v1778
        %v1825 = vmul.f32 %v1185, %v1793
        %v1826 = vpack.c.bf16 %v1794, %v1794
        %v1827 = vpack.c.bf16 %v1795, %v1795
        %v1828 = vpack.c.bf16 %v1796, %v1796
        %v1829 = vpack.c.bf16 %v1797, %v1797
        %v1830 = vpack.c.bf16 %v1798, %v1798
        %v1831 = vpack.c.bf16 %v1799, %v1799
        %v1832 = vpack.c.bf16 %v1800, %v1800
        %v1833 = vpack.c.bf16 %v1801, %v1801
        %v1834 = vpack.c.bf16 %v1802, %v1802
        %v1835 = vpack.c.bf16 %v1803, %v1803
        %v1836 = vpack.c.bf16 %v1804, %v1804
        %v1837 = vpack.c.bf16 %v1805, %v1805
        %v1838 = vpack.c.bf16 %v1806, %v1806
        %v1839 = vpack.c.bf16 %v1807, %v1807
        %v1840 = vpack.c.bf16 %v1808, %v1808
        %v1841 = vpack.c.bf16 %v1809, %v1809
        %v1842 = vpack.c.bf16 %v1810, %v1810
        %v1843 = vpack.c.bf16 %v1811, %v1811
        %v1844 = vpack.c.bf16 %v1812, %v1812
        %v1845 = vpack.c.bf16 %v1813, %v1813
        %v1846 = vpack.c.bf16 %v1814, %v1814
        %v1847 = vpack.c.bf16 %v1815, %v1815
        %v1848 = vpack.c.bf16 %v1816, %v1816
        %v1849 = vpack.c.bf16 %v1817, %v1817
        %v1850 = vpack.c.bf16 %v1818, %v1818
        %v1851 = vpack.c.bf16 %v1819, %v1819
        %v1852 = vpack.c.bf16 %v1820, %v1820
        %v1853 = vpack.c.bf16 %v1821, %v1821
        %v1854 = vpack.c.bf16 %v1822, %v1822
        %v1855 = vpack.c.bf16 %v1823, %v1823
        %v1856 = vpack.c.bf16 %v1824, %v1824
        %v1857 = vpack.c.bf16 %v1825, %v1825
        %1858 = vst [vmem:[%s234] sm:$0xf] %v1826
        %1859 = vst [vmem:[%s234 + $0x4] sm:$0xf] %v1827
        %1860 = vst [vmem:[%s234 + $0x8] sm:$0xf] %v1828
        %1861 = vst [vmem:[%s234 + $0xc] sm:$0xf] %v1829
        %1862 = vst [vmem:[%s234 + $0x10] sm:$0xf] %v1830
        %1863 = vst [vmem:[%s234 + $0x14] sm:$0xf] %v1831
        %1864 = vst [vmem:[%s234 + $0x18] sm:$0xf] %v1832
        %1865 = vst [vmem:[%s234 + $0x1c] sm:$0xf] %v1833
        %1866 = vst [vmem:[%s234 + $0x20] sm:$0xf] %v1834
        %1867 = vst [vmem:[%s234 + $0x24] sm:$0xf] %v1835
        %1868 = vst [vmem:[%s234 + $0x28] sm:$0xf] %v1836
        %1869 = vst [vmem:[%s234 + $0x2c] sm:$0xf] %v1837
        %1870 = vst [vmem:[%s234 + $0x30] sm:$0xf] %v1838
        %1871 = vst [vmem:[%s234 + $0x34] sm:$0xf] %v1839
        %1872 = vst [vmem:[%s234 + $0x38] sm:$0xf] %v1840
        %1873 = vst [vmem:[%s234 + $0x3c] sm:$0xf] %v1841
        %1874 = vst [vmem:[%s234 + $0x40] sm:$0xf] %v1842
        %1875 = vst [vmem:[%s234 + $0x44] sm:$0xf] %v1843
        %1876 = vst [vmem:[%s234 + $0x48] sm:$0xf] %v1844
        %1877 = vst [vmem:[%s234 + $0x4c] sm:$0xf] %v1845
        %1878 = vst [vmem:[%s234 + $0x50] sm:$0xf] %v1846
        %1879 = vst [vmem:[%s234 + $0x54] sm:$0xf] %v1847
        %1880 = vst [vmem:[%s234 + $0x58] sm:$0xf] %v1848
        %1881 = vst [vmem:[%s234 + $0x5c] sm:$0xf] %v1849
        %1882 = vst [vmem:[%s234 + $0x60] sm:$0xf] %v1850
        %1883 = vst [vmem:[%s234 + $0x64] sm:$0xf] %v1851
        %1884 = vst [vmem:[%s234 + $0x68] sm:$0xf] %v1852
        %1885 = vst [vmem:[%s234 + $0x6c] sm:$0xf] %v1853
        %1886 = vst [vmem:[%s234 + $0x70] sm:$0xf] %v1854
        %1887 = vst [vmem:[%s234 + $0x74] sm:$0xf] %v1855
        %1888 = vst [vmem:[%s234 + $0x78] sm:$0xf] %v1856
        %1889 = vst [vmem:[%s234 + $0x7c] sm:$0xf] %v1857
        %s1890 = sand.u32 %s119, 1
        %s1891 = scalar_lea.sflag [#allocation4], %s1890
        %s1892 = sand.u32 %s119, 1
        %s1893 = smul.addr %s1892, 128
        %s1894 = scalar_lea.vmem [#allocation7], %s1893
        // Predicated region
        $region45: #{tpu_custom_call.1} parent=35 // pred_check
          %p1895 = pneg %p129
        $region46: #{tpu_custom_call.1} parent=35 // pred_check_branch
          %1897 = sbr.rel (%p1895) target = $region48
        $region47: #{tpu_custom_call.1} parent=35 // pred_region
          %1899 = vsyncadd %s1891, 0
          %s1900 = smul.addr %s22, 32
          %s1901 = smul.addr %s1900, 4
          %s1902 = scalar_lea.hbm %s4, %s1901
          %s1903 = sshll.u32 %s1894, 4
          %s1904 = int_to_ptr.vmem [resolvable:$true] %s1903
          %s1905 = sshll.u32 %s1902, 4
          %s1906 = int_to_ptr.hbm [resolvable:$true] %s1905
          %1911 = dma.vmem_to_hbm [thread:$0]  %s1904, 2048, %s1906, %s1891, 64, 64, 4
        $region48: #{tpu_custom_call.1} parent=35 // pred_fallthru
          _
      $region36: #{tpu_custom_call.1} parent=5 // pred_fallthru
        _
      %p1912 = scmp.le.s32.totalorder 2, %s17
      // Predicated region
      $region49: #{tpu_custom_call.1} parent=5 // pred_check
        %p1913 = pneg %p1912
      $region50: #{tpu_custom_call.1} parent=5 // pred_check_branch
        %1915 = sbr.rel (%p1913) target = $region52
      $region51: #{tpu_custom_call.1} parent=5 // pred_region
        %s1916 = ssub.s32 %s17, 2
        // Predicated region
        $region53: #{tpu_custom_call.1} parent=51 // pred_check
          %p1917 = pneg %p135
        $region54: #{tpu_custom_call.1} parent=51 // pred_check_branch
          %1919 = sbr.rel (%p1917) target = $region56
        $region55: #{tpu_custom_call.1} parent=51 // pred_region
          %s1920 = sand.u32 %s120, 1
          %s1921 = scalar_lea.sflag [#allocation4], %s1920
          %s1922 = sand.u32 %s120, 1
          %s1923 = smul.addr %s1922, 128
          %s1924 = scalar_lea.vmem [#allocation7], %s1923
          %1926 = dma.done %s1921, 2048
        $region56: #{tpu_custom_call.1} parent=51 // pred_fallthru
          _
      $region52: #{tpu_custom_call.1} parent=5 // pred_fallthru
        _
    $region6: #{tpu_custom_call.1} parent=1 // loop_footer
      %s21 = sadd.s32 1, %s17
    $region7: #{tpu_custom_call.1} parent=1 // loop_footer_branch
      %16 = sbr.rel target = $region3
    $region8: #{tpu_custom_call.1} parent=1 // loop_exit
      _
    %1927 = vsyncpa [#allocation3], 1
    %s1928 = scalar_lea.sflag [#allocation3], 1
    %1929 = vsyncpa %s1928, 1
    %1930 = vsyncpa [#allocation6], 1
    %1931 = vsyncpa [#allocation4], 1
    %s1932 = scalar_lea.sflag [#allocation4], 1
    %1933 = vsyncpa %s1932, 1

</llo_original>
